<compile_context>
chip_gen: v7x
topology: tpu7x:2x2x1
jax: 0.10.0
libtpu: 0.0.40
codegen_flags: <defaults>
</compile_context>

<pallas_src>
import math

import jax
import jax.numpy as jnp
import numpy as np
from jax.experimental import pallas as pl
from jax.experimental.pallas import tpu as pltpu

# ----- synthetic config (small, lane/sublane friendly) -----
S = 16            # state space size
D = 8             # data dimension (cfg.data.shape == (D,))
D_MODEL = 32
HIDDEN = 64
TEMB = 32         # temb_dim (4*temb_dim = 128 -> lane aligned)
NUM_LAYERS = 2
TIME_SCALE = 1000.0
LN_EPS = 1e-5     # nn.LayerNorm default
DS = D * S        # flat logits width (= 128 here, lane aligned)

# --- in-kernel sin/cos: Cody-Waite split of pi + Taylor coefficients ---
PI_HI = 3.140625                    # 8-bit mantissa -> k*PI_HI exact for k <= ~2^15
PI_LO = math.pi - PI_HI
INV_PI = 1.0 / math.pi
_S3, _S5, _S7, _S9, _S11 = -1.0 / 6, 1.0 / 120, -1.0 / 5040, 1.0 / 362880, -1.0 / 39916800
_C2, _C4, _C6, _C8, _C10 = -0.5, 1.0 / 24, -1.0 / 720, 1.0 / 40320, -1.0 / 3628800


def residual_mlp_kernel(x_ref, times_ref, freqs_ref,
                        wt1_ref, bt1_ref, wtp_ref,
                        wxe_ref, bin_ref,
                        w1_ref, w2_ref, lp_ref,
                        wout_ref, bout_ref,
                        out_ref):
    f32 = jnp.float32

    def dot(a, b):
        # bf16 operands -> single-pass MXU; f32 accumulation.
        return jnp.dot(a.astype(jnp.bfloat16), b, preferred_element_type=f32)

    # --- sinusoidal time embedding, computed in-kernel from (TB,1) times ---
    # arg = times*1000*freq; reduce mod pi with a two-constant pi (exact for the
    # ~[0,1000] argument range), track parity sign, evaluate Taylor polynomials.
    arg = (times_ref[...] * TIME_SCALE) * freqs_ref[...]          # (TB, TEMB)
    k = jnp.floor(arg * INV_PI + 0.5)                             # nearest multiple of pi
    parity = k - 2.0 * jnp.floor(k * 0.5)                         # k mod 2, exact in f32
    sign = 1.0 - 2.0 * parity
    r = (arg - k * PI_HI) - k * PI_LO                             # |r| <= pi/2 (+eps)
    r2 = r * r
    sin_r = r * (1.0 + r2 * (_S3 + r2 * (_S5 + r2 * (_S7 + r2 * (_S9 + r2 * _S11)))))
    cos_r = 1.0 + r2 * (_C2 + r2 * (_C4 + r2 * (_C6 + r2 * (_C8 + r2 * _C10))))
    col = jax.lax.broadcasted_iota(jnp.int32, (1, TEMB), 1)
    temb_in = jnp.where(col < (TEMB // 2), sign * sin_r, sign * cos_r)   # [sin | cos]

    # --- temb MLP, host-composed: relu(temb_in @ wt1 + bt1) @ (wt2 @ wt_all) ---
    t = jnp.maximum(dot(temb_in, wt1_ref[...]) + bt1_ref[...], 0.0)      # (TB, 2*TEMB)
    temb_proj = dot(t, wtp_ref[...])                                     # (TB, L*HIDDEN)

    # --- input linear + one-hot expansion in ONE shallow matmul ---
    # wxe = [expand (D, DS) | win*(2/S) (D, D_MODEL)]; x values 0..15 are exact in
    # bf16 and expand is 0/1, so the one-hot part of the product is exact.
    x_f = x_ref[...].astype(f32)                                         # (TB, D)
    xe = dot(x_f, wxe_ref[...])                                          # (TB, DS + D_MODEL)
    x_exp = xe[:, :DS]                                                   # x[b, c // S]
    h = xe[:, DS:] + bin_ref[...]                                        # (TB, D_MODEL)

    # --- residual blocks (static unroll) ---
    for n in range(NUM_LAYERS):
        lp = lp_ref[n]                               # (4, 128), lane-aligned rows
        b1n = lp[0:1, :HIDDEN]                       # = b1 + bt + bt2@wt[n]  (host fold)
        b2 = lp[1:2, :D_MODEL]

        a = dot(h, w1_ref[n]) + temb_proj[:, n * HIDDEN:(n + 1) * HIDDEN] + b1n
        a = jnp.maximum(a, 0.0)                      # ReLU
        a = dot(a, w2_ref[n]) + b2                   # (TB, D_MODEL)
        rres = h + a                                 # residual
        mean = jnp.mean(rres, axis=-1, keepdims=True)
        var = jnp.mean((rres - mean) ** 2, axis=-1, keepdims=True)
        hn = (rres - mean) * jax.lax.rsqrt(var + LN_EPS)
        if n < NUM_LAYERS - 1:
            h = hn * lp[2:3, :D_MODEL] + lp[3:4, :D_MODEL]
        else:
            h = hn                                   # last LN gamma/beta folded into wout/bout

    # --- output head (+ one-hot(x, S) rebuilt from x_exp) ---
    out = dot(h, wout_ref[...]) + bout_ref[...]                          # (TB, DS)
    c = jax.lax.broadcasted_iota(jnp.int32, (1, DS), 1).astype(f32)
    d_of_c = jnp.floor((c + 0.5) * (1.0 / S))
    s_of_c = c - d_of_c * S                                              # column's state index
    one_hot = (jnp.abs(x_exp - s_of_c) < 0.5).astype(f32)                # robust (no exact ==)

    out_ref[...] = out + one_hot


def make_params(key):
    ks = iter(jax.random.split(key, 16))

    def rnd(shape, scale=0.1):
        return jax.random.normal(next(ks), shape, dtype=jnp.float32) * scale

    return dict(
        wt1=rnd((TEMB, 2 * TEMB)),               bt1=rnd((1, 2 * TEMB), 0.02),
        wt2=rnd((2 * TEMB, 4 * TEMB)),           bt2=rnd((1, 4 * TEMB), 0.02),
        win=rnd((D, D_MODEL)),                   bin=rnd((1, D_MODEL), 0.02),
        w1=rnd((NUM_LAYERS, D_MODEL, HIDDEN)),   b1=rnd((NUM_LAYERS, 1, HIDDEN), 0.02),
        wt=rnd((NUM_LAYERS, 4 * TEMB, HIDDEN)),  bt=rnd((NUM_LAYERS, 1, HIDDEN), 0.02),
        w2=rnd((NUM_LAYERS, HIDDEN, D_MODEL)),   b2=rnd((NUM_LAYERS, 1, D_MODEL), 0.02),
        lng=jnp.ones((NUM_LAYERS, 1, D_MODEL), jnp.float32),
        lnb=jnp.zeros((NUM_LAYERS, 1, D_MODEL), jnp.float32),
        wout=rnd((D_MODEL, D * S)),              bout=rnd((1, D * S), 0.02),
    )


def _pick_batch_tile(B):
    # Large tiles amortize the ~0.35us/grid-step overhead; keep >=4 grid steps
    # (>=2 per TensorCore on v7x's megacore) so DMA/compute/writeback pipeline.
    for tb in (1024, 512, 256, 128, 64, 32, 16, 8):
        if B % tb == 0 and B // tb >= 4:
            return tb
    for tb in (1024, 512, 256, 128, 64, 32, 16, 8):
        if B % tb == 0:
            return tb
    return B


def residual_mlp_forward(x, times, params, *, batch_tile=None):
    """x: (B, D) int32 in [0, S); times: (B,) float32 -> logits (B, D, S) float32."""
    B = x.shape[0]
    TB = batch_tile if batch_tile is not None else _pick_batch_tile(B)
    assert B % TB == 0, "batch must be divisible by the batch tile"

    f32, bf16 = jnp.float32, jnp.bfloat16

    # ---- host-side algebra / packing (semantics-preserving folds) ----
    # Compose the temb chain:  temb @ wt[n] = relu(.)@wt2@wt[n];  bt2@wt[n] -> bias.
    wt_all = jnp.transpose(params['wt'], (1, 0, 2)).reshape(4 * TEMB, NUM_LAYERS * HIDDEN)
    wtp = params['wt2'] @ wt_all                                        # (2*TEMB, L*HIDDEN)
    bt2_proj = (params['bt2'] @ wt_all).reshape(NUM_LAYERS, 1, HIDDEN)
    b1n = params['b1'] + params['bt'] + bt2_proj                        # all hidden-path biases

    # Fold 2x/S - 1 into the input linear; share one RHS with the one-hot expansion.
    win_fold = params['win'] * (2.0 / S)
    bin_fold = params['bin'] - jnp.sum(params['win'], axis=0, keepdims=True)
    cols = jnp.arange(DS, dtype=jnp.int32)
    expand = (cols[None, :] // S == jnp.arange(D, dtype=jnp.int32)[:, None]).astype(f32)
    wxe = jnp.concatenate([expand, win_fold], axis=1)                   # (D, DS + D_MODEL)

    # Fold the last LayerNorm's gamma/beta into the output linear.
    g_last = params['lng'][NUM_LAYERS - 1]                              # (1, D_MODEL)
    b_last = params['lnb'][NUM_LAYERS - 1]
    wout_fold = params['wout'] * g_last.reshape(D_MODEL, 1)
    bout_fold = params['bout'] + b_last @ params['wout']

    # Lane-aligned per-layer small-vector pack: (L, 4, 128) rows = b1n, b2, lng, lnb.
    def pad128(v):
        return jnp.pad(v, ((0, 0), (0, 0), (0, 128 - v.shape[-1])))
    lp = jnp.concatenate([pad128(b1n), pad128(params['b2']),
                          pad128(params['lng']), pad128(params['lnb'])], axis=1)

    # Sinusoidal frequencies, duplicated for the [sin | cos] halves.
    half = TEMB // 2
    freqs = jnp.exp(jnp.arange(half, dtype=f32) * (-math.log(10000.0) / (half - 1)))
    freqs_row = jnp.concatenate([freqs, freqs]).reshape(1, TEMB)

    times2d = times.reshape(B, 1).astype(f32)

    # bf16 weights for single-pass MXU; biases / LN params stay f32.
    # TODO(synk): optionally ship x as int8 and emit bf16 logits if downstream accepts it.
    wt1_b = params['wt1'].astype(bf16)
    wtp_b = wtp.astype(bf16)
    wxe_b = wxe.astype(bf16)
    w1_b = params['w1'].astype(bf16)
    w2_b = params['w2'].astype(bf16)
    wout_b = wout_fold.astype(bf16)

    def bspec(a):  # tiled over batch
        r = a.ndim - 1
        return pl.BlockSpec((TB,) + a.shape[1:], lambda i, _r=r: (i,) + (0,) * _r)

    def fspec(a):  # full array, replicated across the grid
        return pl.BlockSpec(a.shape, lambda i, _r=a.ndim: (0,) * _r)

    ins = [x, times2d, freqs_row,
           wt1_b, params['bt1'], wtp_b,
           wxe_b, bin_fold,
           w1_b, w2_b, lp,
           wout_b, bout_fold]
    in_specs = [bspec(x), bspec(times2d)] + [fspec(a) for a in ins[2:]]

    out_flat = pl.pallas_call(
        residual_mlp_kernel,
        out_shape=jax.ShapeDtypeStruct((B, DS), jnp.float32),
        grid=(B // TB,),
        in_specs=in_specs,
        out_specs=pl.BlockSpec((TB, DS), lambda i: (i, 0)),
        compiler_params=pltpu.CompilerParams(dimension_semantics=("parallel",)),
    )(*ins)
    return out_flat.reshape(B, D, S)


def _timestep_embedding(times):
    half = TEMB // 2
    freqs = jnp.exp(jnp.arange(half, dtype=jnp.float32) * (-math.log(10000.0) / (half - 1)))
    arg = (times.astype(jnp.float32) * TIME_SCALE)[:, None] * freqs[None, :]
    return jnp.concatenate([jnp.sin(arg), jnp.cos(arg)], axis=1)  # (B, TEMB)


def ref_forward(x, times, p):
    """Pure-JAX f32/HIGHEST reference matching the PyTorch semantics."""
    hp = jax.lax.Precision.HIGHEST
    dot = lambda a, b: jnp.dot(a, b, precision=hp)
    temb_in = _timestep_embedding(times)
    t = jnp.maximum(dot(temb_in, p['wt1']) + p['bt1'], 0.0)
    temb = dot(t, p['wt2']) + p['bt2']
    h = x.astype(jnp.float32) / S * 2.0 - 1.0
    h = dot(h, p['win']) + p['bin']
    for n in range(NUM_LAYERS):
        a = dot(h, p['w1'][n]) + p['b1'][n] + dot(temb, p['wt'][n]) + p['bt'][n]
        a = jnp.maximum(a, 0.0)
        a = dot(a, p['w2'][n]) + p['b2'][n]
        r = h + a
        mean = jnp.mean(r, axis=-1, keepdims=True)
        var = jnp.mean((r - mean) ** 2, axis=-1, keepdims=True)
        h = (r - mean) / jnp.sqrt(var + LN_EPS) * p['lng'][n] + p['lnb'][n]
    out = dot(h, p['wout']) + p['bout']
    return out.reshape(x.shape[0], D, S) + jax.nn.one_hot(x, S, dtype=jnp.float32)


if __name__ == "__main__":
    key = jax.random.PRNGKey(0)
    kx, kt, kp = jax.random.split(key, 3)
    B = 256   # default tile -> TB=64, grid=(4,): >=2 pipelined steps per v7x TensorCore
    x = jax.random.randint(kx, (B, D), 0, S, dtype=jnp.int32)
    times = jax.random.uniform(kt, (B,), dtype=jnp.float32)
    params = make_params(kp)

    logits = residual_mlp_forward(x, times, params)
    logits = jax.block_until_ready(logits)

    ref = ref_forward(x, times, params)
    # Kernel uses bf16 MXU operands (f32 accumulation) vs. an f32/HIGHEST reference:
    # expected ~0.2-0.5% relative deviation after two LayerNorm'd residual blocks,
    # so validate at 2e-2 (max observed deviation is well below this bound).
    np.testing.assert_allclose(np.asarray(logits), np.asarray(ref), rtol=2e-2, atol=2e-2)
    assert logits.shape == (B, D, S)
    print("KERNEL_OK")
</pallas_src>

<mosaic_0001>
module attributes {stable_mosaic.version = 11 : i64} {
  func.func @residual_mlp_kernel(%arg0: i32, %arg1: memref<64x8xi32, #tpu.memory_space<vmem>>, %arg2: memref<64x1xf32, #tpu.memory_space<vmem>>, %arg3: memref<1x32xf32, #tpu.memory_space<vmem>>, %arg4: memref<32x64xbf16, #tpu.memory_space<vmem>>, %arg5: memref<1x64xf32, #tpu.memory_space<vmem>>, %arg6: memref<64x128xbf16, #tpu.memory_space<vmem>>, %arg7: memref<8x160xbf16, #tpu.memory_space<vmem>>, %arg8: memref<1x32xf32, #tpu.memory_space<vmem>>, %arg9: memref<2x32x64xbf16, #tpu.memory_space<vmem>>, %arg10: memref<2x64x32xbf16, #tpu.memory_space<vmem>>, %arg11: memref<2x4x128xf32, #tpu.memory_space<vmem>>, %arg12: memref<32x128xbf16, #tpu.memory_space<vmem>>, %arg13: memref<1x128xf32, #tpu.memory_space<vmem>>, %arg14: memref<64x128xf32, #tpu.memory_space<vmem>>) attributes {dimension_semantics = [#tpu.dimension_semantics<parallel>], iteration_bounds = array<i64: 4>, scalar_prefetch = 0 : i64, scratch_operands = 0 : i64, tpu.core_type = #tpu.core_type<tc>, window_params = [{transform_indices = @transform_0, window_bounds = array<i64: 64, 8>}, {transform_indices = @transform_1, window_bounds = array<i64: 64, 1>}, {pipeline_mode = #tpu.pipeline_mode<synchronous>, transform_indices = @transform_2, window_bounds = array<i64: 1, 32>}, {pipeline_mode = #tpu.pipeline_mode<synchronous>, transform_indices = @transform_3, window_bounds = array<i64: 32, 64>}, {pipeline_mode = #tpu.pipeline_mode<synchronous>, transform_indices = @transform_4, window_bounds = array<i64: 1, 64>}, {pipeline_mode = #tpu.pipeline_mode<synchronous>, transform_indices = @transform_5, window_bounds = array<i64: 64, 128>}, {pipeline_mode = #tpu.pipeline_mode<synchronous>, transform_indices = @transform_6, window_bounds = array<i64: 8, 160>}, {pipeline_mode = #tpu.pipeline_mode<synchronous>, transform_indices = @transform_7, window_bounds = array<i64: 1, 32>}, {pipeline_mode = #tpu.pipeline_mode<synchronous>, transform_indices = @transform_8, window_bounds = array<i64: 2, 32, 64>}, {pipeline_mode = #tpu.pipeline_mode<synchronous>, transform_indices = @transform_9, window_bounds = array<i64: 2, 64, 32>}, {pipeline_mode = #tpu.pipeline_mode<synchronous>, transform_indices = @transform_10, window_bounds = array<i64: 2, 4, 128>}, {pipeline_mode = #tpu.pipeline_mode<synchronous>, transform_indices = @transform_11, window_bounds = array<i64: 32, 128>}, {pipeline_mode = #tpu.pipeline_mode<synchronous>, transform_indices = @transform_12, window_bounds = array<i64: 1, 128>}, {transform_indices = @transform_13, window_bounds = array<i64: 64, 128>}]} {
    %c0 = arith.constant 0 : index
    %c0_0 = arith.constant 0 : index
    %0 = vector.load %arg2[%c0, %c0_0] : memref<64x1xf32, #tpu.memory_space<vmem>>, vector<64x1xf32>
    %cst = arith.constant 1.000000e+03 : f32
    %1 = vector.broadcast %cst : f32 to vector<64x1xf32>
    %2 = arith.mulf %0, %1 : vector<64x1xf32>
    %c0_1 = arith.constant 0 : index
    %c0_2 = arith.constant 0 : index
    %3 = vector.load %arg3[%c0_1, %c0_2] : memref<1x32xf32, #tpu.memory_space<vmem>>, vector<1x32xf32>
    %4 = vector.broadcast %2 : vector<64x1xf32> to vector<64x32xf32>
    %5 = vector.broadcast %3 : vector<1x32xf32> to vector<64x32xf32>
    %6 = arith.mulf %4, %5 : vector<64x32xf32>
    %cst_3 = arith.constant 0.318309873 : f32
    %7 = vector.broadcast %cst_3 : f32 to vector<64x32xf32>
    %8 = arith.mulf %6, %7 : vector<64x32xf32>
    %cst_4 = arith.constant 5.000000e-01 : f32
    %9 = vector.broadcast %cst_4 : f32 to vector<64x32xf32>
    %10 = arith.addf %8, %9 : vector<64x32xf32>
    %11 = math.floor %10 : vector<64x32xf32>
    %cst_5 = arith.constant 5.000000e-01 : f32
    %12 = vector.broadcast %cst_5 : f32 to vector<64x32xf32>
    %13 = arith.mulf %11, %12 : vector<64x32xf32>
    %14 = math.floor %13 : vector<64x32xf32>
    %cst_6 = arith.constant 2.000000e+00 : f32
    %15 = vector.broadcast %cst_6 : f32 to vector<64x32xf32>
    %16 = arith.mulf %15, %14 : vector<64x32xf32>
    %17 = arith.subf %11, %16 : vector<64x32xf32>
    %cst_7 = arith.constant 2.000000e+00 : f32
    %18 = vector.broadcast %cst_7 : f32 to vector<64x32xf32>
    %19 = arith.mulf %18, %17 : vector<64x32xf32>
    %cst_8 = arith.constant 1.000000e+00 : f32
    %20 = vector.broadcast %cst_8 : f32 to vector<64x32xf32>
    %21 = arith.subf %20, %19 : vector<64x32xf32>
    %cst_9 = arith.constant 3.140625 : f32
    %22 = vector.broadcast %cst_9 : f32 to vector<64x32xf32>
    %23 = arith.mulf %11, %22 : vector<64x32xf32>
    %24 = arith.subf %6, %23 : vector<64x32xf32>
    %cst_10 = arith.constant 9.67653584E-4 : f32
    %25 = vector.broadcast %cst_10 : f32 to vector<64x32xf32>
    %26 = arith.mulf %11, %25 : vector<64x32xf32>
    %27 = arith.subf %24, %26 : vector<64x32xf32>
    %28 = arith.mulf %27, %27 : vector<64x32xf32>
    %cst_11 = arith.constant -2.50521079E-8 : f32
    %29 = vector.broadcast %cst_11 : f32 to vector<64x32xf32>
    %30 = arith.mulf %28, %29 : vector<64x32xf32>
    %cst_12 = arith.constant 2.75573188E-6 : f32
    %31 = vector.broadcast %cst_12 : f32 to vector<64x32xf32>
    %32 = arith.addf %31, %30 : vector<64x32xf32>
    %33 = arith.mulf %28, %32 : vector<64x32xf32>
    %cst_13 = arith.constant -1.98412701E-4 : f32
    %34 = vector.broadcast %cst_13 : f32 to vector<64x32xf32>
    %35 = arith.addf %34, %33 : vector<64x32xf32>
    %36 = arith.mulf %28, %35 : vector<64x32xf32>
    %cst_14 = arith.constant 0.00833333377 : f32
    %37 = vector.broadcast %cst_14 : f32 to vector<64x32xf32>
    %38 = arith.addf %37, %36 : vector<64x32xf32>
    %39 = arith.mulf %28, %38 : vector<64x32xf32>
    %cst_15 = arith.constant -0.166666672 : f32
    %40 = vector.broadcast %cst_15 : f32 to vector<64x32xf32>
    %41 = arith.addf %40, %39 : vector<64x32xf32>
    %42 = arith.mulf %28, %41 : vector<64x32xf32>
    %cst_16 = arith.constant 1.000000e+00 : f32
    %43 = vector.broadcast %cst_16 : f32 to vector<64x32xf32>
    %44 = arith.addf %43, %42 : vector<64x32xf32>
    %45 = arith.mulf %27, %44 : vector<64x32xf32>
    %cst_17 = arith.constant -2.755732E-7 : f32
    %46 = vector.broadcast %cst_17 : f32 to vector<64x32xf32>
    %47 = arith.mulf %28, %46 : vector<64x32xf32>
    %cst_18 = arith.constant 2.48015876E-5 : f32
    %48 = vector.broadcast %cst_18 : f32 to vector<64x32xf32>
    %49 = arith.addf %48, %47 : vector<64x32xf32>
    %50 = arith.mulf %28, %49 : vector<64x32xf32>
    %cst_19 = arith.constant -0.00138888892 : f32
    %51 = vector.broadcast %cst_19 : f32 to vector<64x32xf32>
    %52 = arith.addf %51, %50 : vector<64x32xf32>
    %53 = arith.mulf %28, %52 : vector<64x32xf32>
    %cst_20 = arith.constant 0.0416666679 : f32
    %54 = vector.broadcast %cst_20 : f32 to vector<64x32xf32>
    %55 = arith.addf %54, %53 : vector<64x32xf32>
    %56 = arith.mulf %28, %55 : vector<64x32xf32>
    %cst_21 = arith.constant -5.000000e-01 : f32
    %57 = vector.broadcast %cst_21 : f32 to vector<64x32xf32>
    %58 = arith.addf %57, %56 : vector<64x32xf32>
    %59 = arith.mulf %28, %58 : vector<64x32xf32>
    %cst_22 = arith.constant 1.000000e+00 : f32
    %60 = vector.broadcast %cst_22 : f32 to vector<64x32xf32>
    %61 = arith.addf %60, %59 : vector<64x32xf32>
    %62 = tpu.iota {dimensions = array<i32: 1>} : vector<1x32xi32>
    %c16_i32 = arith.constant 16 : i32
    %63 = vector.broadcast %c16_i32 : i32 to vector<1x32xi32>
    %64 = arith.cmpi slt, %62, %63 : vector<1x32xi32>
    %65 = arith.mulf %21, %45 : vector<64x32xf32>
    %66 = arith.mulf %21, %61 : vector<64x32xf32>
    %67 = vector.shape_cast %64 : vector<1x32xi1> to vector<1x32xi1>
    %68 = vector.broadcast %67 : vector<1x32xi1> to vector<64x32xi1>
    %69 = arith.select %68, %65, %66 : vector<64x32xi1>, vector<64x32xf32>
    %c0_23 = arith.constant 0 : index
    %c0_24 = arith.constant 0 : index
    %70 = vector.load %arg4[%c0_23, %c0_24] : memref<32x64xbf16, #tpu.memory_space<vmem>>, vector<32x64xbf16>
    %71 = arith.truncf %69 : vector<64x32xf32> to vector<64x32xbf16>
    %cst_25 = arith.constant dense<0.000000e+00> : vector<64x64xf32>
    %72 = tpu.matmul %71, %70, %cst_25 {dimension_numbers = #tpu.dot_dimension_numbers<[1], [0], [0], [1], [0, 0, 1, 1], [], []>} : vector<64x32xbf16>, vector<32x64xbf16>, vector<64x64xf32> -> vector<64x64xf32>
    %c0_26 = arith.constant 0 : index
    %c0_27 = arith.constant 0 : index
    %73 = vector.load %arg5[%c0_26, %c0_27] : memref<1x64xf32, #tpu.memory_space<vmem>>, vector<1x64xf32>
    %74 = vector.broadcast %73 : vector<1x64xf32> to vector<64x64xf32>
    %75 = arith.addf %72, %74 : vector<64x64xf32>
    %cst_28 = arith.constant 0.000000e+00 : f32
    %76 = vector.broadcast %cst_28 : f32 to vector<64x64xf32>
    %77 = arith.maximumf %75, %76 : vector<64x64xf32>
    %c0_29 = arith.constant 0 : index
    %c0_30 = arith.constant 0 : index
    %78 = vector.load %arg6[%c0_29, %c0_30] : memref<64x128xbf16, #tpu.memory_space<vmem>>, vector<64x128xbf16>
    %79 = arith.truncf %77 : vector<64x64xf32> to vector<64x64xbf16>
    %cst_31 = arith.constant dense<0.000000e+00> : vector<64x128xf32>
    %80 = tpu.matmul %79, %78, %cst_31 {dimension_numbers = #tpu.dot_dimension_numbers<[1], [0], [0], [1], [0, 0, 1, 1], [], []>} : vector<64x64xbf16>, vector<64x128xbf16>, vector<64x128xf32> -> vector<64x128xf32>
    %c0_32 = arith.constant 0 : index
    %c0_33 = arith.constant 0 : index
    %81 = vector.load %arg1[%c0_32, %c0_33] : memref<64x8xi32, #tpu.memory_space<vmem>>, vector<64x8xi32>
    %82 = arith.sitofp %81 : vector<64x8xi32> to vector<64x8xf32>
    %c0_34 = arith.constant 0 : index
    %c0_35 = arith.constant 0 : index
    %83 = vector.load %arg7[%c0_34, %c0_35] : memref<8x160xbf16, #tpu.memory_space<vmem>>, vector<8x160xbf16>
    %84 = arith.truncf %82 : vector<64x8xf32> to vector<64x8xbf16>
    %cst_36 = arith.constant dense<0.000000e+00> : vector<64x160xf32>
    %85 = tpu.matmul %84, %83, %cst_36 {dimension_numbers = #tpu.dot_dimension_numbers<[1], [0], [0], [1], [0, 0, 1, 1], [], []>} : vector<64x8xbf16>, vector<8x160xbf16>, vector<64x160xf32> -> vector<64x160xf32>
    %86 = vector.extract_strided_slice %85 {offsets = [0, 0], sizes = [64, 128], strides = [1, 1]} : vector<64x160xf32> to vector<64x128xf32>
    %87 = vector.extract_strided_slice %85 {offsets = [0, 128], sizes = [64, 32], strides = [1, 1]} : vector<64x160xf32> to vector<64x32xf32>
    %c0_37 = arith.constant 0 : index
    %c0_38 = arith.constant 0 : index
    %88 = vector.load %arg8[%c0_37, %c0_38] : memref<1x32xf32, #tpu.memory_space<vmem>>, vector<1x32xf32>
    %89 = vector.broadcast %88 : vector<1x32xf32> to vector<64x32xf32>
    %90 = arith.addf %87, %89 : vector<64x32xf32>
    %c0_39 = arith.constant 0 : index
    %c0_40 = arith.constant 0 : index
    %c0_41 = arith.constant 0 : index
    %91 = vector.load %arg11[%c0_39, %c0_40, %c0_41] : memref<2x4x128xf32, #tpu.memory_space<vmem>>, vector<1x4x128xf32>
    %92 = vector.shape_cast %91 : vector<1x4x128xf32> to vector<4x128xf32>
    %93 = vector.extract_strided_slice %92 {offsets = [0, 0], sizes = [1, 64], strides = [1, 1]} : vector<4x128xf32> to vector<1x64xf32>
    %94 = vector.extract_strided_slice %92 {offsets = [1, 0], sizes = [1, 32], strides = [1, 1]} : vector<4x128xf32> to vector<1x32xf32>
    %c0_42 = arith.constant 0 : index
    %c0_43 = arith.constant 0 : index
    %c0_44 = arith.constant 0 : index
    %95 = vector.load %arg9[%c0_42, %c0_43, %c0_44] : memref<2x32x64xbf16, #tpu.memory_space<vmem>>, vector<1x32x64xbf16>
    %96 = vector.shape_cast %95 : vector<1x32x64xbf16> to vector<32x64xbf16>
    %97 = arith.truncf %90 : vector<64x32xf32> to vector<64x32xbf16>
    %cst_45 = arith.constant dense<0.000000e+00> : vector<64x64xf32>
    %98 = tpu.matmul %97, %96, %cst_45 {dimension_numbers = #tpu.dot_dimension_numbers<[1], [0], [0], [1], [0, 0, 1, 1], [], []>} : vector<64x32xbf16>, vector<32x64xbf16>, vector<64x64xf32> -> vector<64x64xf32>
    %99 = vector.extract_strided_slice %80 {offsets = [0, 0], sizes = [64, 64], strides = [1, 1]} : vector<64x128xf32> to vector<64x64xf32>
    %100 = arith.addf %98, %99 : vector<64x64xf32>
    %101 = vector.broadcast %93 : vector<1x64xf32> to vector<64x64xf32>
    %102 = arith.addf %100, %101 : vector<64x64xf32>
    %cst_46 = arith.constant 0.000000e+00 : f32
    %103 = vector.broadcast %cst_46 : f32 to vector<64x64xf32>
    %104 = arith.maximumf %102, %103 : vector<64x64xf32>
    %c0_47 = arith.constant 0 : index
    %c0_48 = arith.constant 0 : index
    %c0_49 = arith.constant 0 : index
    %105 = vector.load %arg10[%c0_47, %c0_48, %c0_49] : memref<2x64x32xbf16, #tpu.memory_space<vmem>>, vector<1x64x32xbf16>
    %106 = vector.shape_cast %105 : vector<1x64x32xbf16> to vector<64x32xbf16>
    %107 = arith.truncf %104 : vector<64x64xf32> to vector<64x64xbf16>
    %cst_50 = arith.constant dense<0.000000e+00> : vector<64x32xf32>
    %108 = tpu.matmul %107, %106, %cst_50 {dimension_numbers = #tpu.dot_dimension_numbers<[1], [0], [0], [1], [0, 0, 1, 1], [], []>} : vector<64x64xbf16>, vector<64x32xbf16>, vector<64x32xf32> -> vector<64x32xf32>
    %109 = vector.broadcast %94 : vector<1x32xf32> to vector<64x32xf32>
    %110 = arith.addf %108, %109 : vector<64x32xf32>
    %111 = arith.addf %90, %110 : vector<64x32xf32>
    %cst_51 = arith.constant dense<0.000000e+00> : vector<64xf32>
    %112 = vector.multi_reduction <add>, %111, %cst_51 [1] : vector<64x32xf32> to vector<64xf32>
    %113 = vector.shape_cast %112 : vector<64xf32> to vector<64x1xf32>
    %cst_52 = arith.constant 3.200000e+01 : f32
    %114 = vector.broadcast %cst_52 : f32 to vector<64x1xf32>
    %115 = arith.divf %113, %114 : vector<64x1xf32>
    %116 = vector.broadcast %115 : vector<64x1xf32> to vector<64x32xf32>
    %117 = arith.subf %111, %116 : vector<64x32xf32>
    %118 = arith.mulf %117, %117 : vector<64x32xf32>
    %cst_53 = arith.constant dense<0.000000e+00> : vector<64xf32>
    %119 = vector.multi_reduction <add>, %118, %cst_53 [1] : vector<64x32xf32> to vector<64xf32>
    %120 = vector.shape_cast %119 : vector<64xf32> to vector<64x1xf32>
    %cst_54 = arith.constant 3.200000e+01 : f32
    %121 = vector.broadcast %cst_54 : f32 to vector<64x1xf32>
    %122 = arith.divf %120, %121 : vector<64x1xf32>
    %123 = vector.broadcast %115 : vector<64x1xf32> to vector<64x32xf32>
    %124 = arith.subf %111, %123 : vector<64x32xf32>
    %cst_55 = arith.constant 9.99999974E-6 : f32
    %125 = vector.broadcast %cst_55 : f32 to vector<64x1xf32>
    %126 = arith.addf %122, %125 : vector<64x1xf32>
    %127 = math.rsqrt %126 : vector<64x1xf32>
    %128 = vector.broadcast %127 : vector<64x1xf32> to vector<64x32xf32>
    %129 = arith.mulf %124, %128 : vector<64x32xf32>
    %130 = vector.extract_strided_slice %92 {offsets = [2, 0], sizes = [1, 32], strides = [1, 1]} : vector<4x128xf32> to vector<1x32xf32>
    %131 = vector.broadcast %130 : vector<1x32xf32> to vector<64x32xf32>
    %132 = arith.mulf %129, %131 : vector<64x32xf32>
    %133 = vector.extract_strided_slice %92 {offsets = [3, 0], sizes = [1, 32], strides = [1, 1]} : vector<4x128xf32> to vector<1x32xf32>
    %134 = vector.broadcast %133 : vector<1x32xf32> to vector<64x32xf32>
    %135 = arith.addf %132, %134 : vector<64x32xf32>
    %c1 = arith.constant 1 : index
    %c0_56 = arith.constant 0 : index
    %c0_57 = arith.constant 0 : index
    %136 = vector.load %arg11[%c1, %c0_56, %c0_57] : memref<2x4x128xf32, #tpu.memory_space<vmem>>, vector<1x4x128xf32>
    %137 = vector.shape_cast %136 : vector<1x4x128xf32> to vector<4x128xf32>
    %138 = vector.extract_strided_slice %137 {offsets = [0, 0], sizes = [1, 64], strides = [1, 1]} : vector<4x128xf32> to vector<1x64xf32>
    %139 = vector.extract_strided_slice %137 {offsets = [1, 0], sizes = [1, 32], strides = [1, 1]} : vector<4x128xf32> to vector<1x32xf32>
    %c1_58 = arith.constant 1 : index
    %c0_59 = arith.constant 0 : index
    %c0_60 = arith.constant 0 : index
    %140 = vector.load %arg9[%c1_58, %c0_59, %c0_60] : memref<2x32x64xbf16, #tpu.memory_space<vmem>>, vector<1x32x64xbf16>
    %141 = vector.shape_cast %140 : vector<1x32x64xbf16> to vector<32x64xbf16>
    %142 = arith.truncf %135 : vector<64x32xf32> to vector<64x32xbf16>
    %cst_61 = arith.constant dense<0.000000e+00> : vector<64x64xf32>
    %143 = tpu.matmul %142, %141, %cst_61 {dimension_numbers = #tpu.dot_dimension_numbers<[1], [0], [0], [1], [0, 0, 1, 1], [], []>} : vector<64x32xbf16>, vector<32x64xbf16>, vector<64x64xf32> -> vector<64x64xf32>
    %144 = vector.extract_strided_slice %80 {offsets = [0, 64], sizes = [64, 64], strides = [1, 1]} : vector<64x128xf32> to vector<64x64xf32>
    %145 = arith.addf %143, %144 : vector<64x64xf32>
    %146 = vector.broadcast %138 : vector<1x64xf32> to vector<64x64xf32>
    %147 = arith.addf %145, %146 : vector<64x64xf32>
    %cst_62 = arith.constant 0.000000e+00 : f32
    %148 = vector.broadcast %cst_62 : f32 to vector<64x64xf32>
    %149 = arith.maximumf %147, %148 : vector<64x64xf32>
    %c1_63 = arith.constant 1 : index
    %c0_64 = arith.constant 0 : index
    %c0_65 = arith.constant 0 : index
    %150 = vector.load %arg10[%c1_63, %c0_64, %c0_65] : memref<2x64x32xbf16, #tpu.memory_space<vmem>>, vector<1x64x32xbf16>
    %151 = vector.shape_cast %150 : vector<1x64x32xbf16> to vector<64x32xbf16>
    %152 = arith.truncf %149 : vector<64x64xf32> to vector<64x64xbf16>
    %cst_66 = arith.constant dense<0.000000e+00> : vector<64x32xf32>
    %153 = tpu.matmul %152, %151, %cst_66 {dimension_numbers = #tpu.dot_dimension_numbers<[1], [0], [0], [1], [0, 0, 1, 1], [], []>} : vector<64x64xbf16>, vector<64x32xbf16>, vector<64x32xf32> -> vector<64x32xf32>
    %154 = vector.broadcast %139 : vector<1x32xf32> to vector<64x32xf32>
    %155 = arith.addf %153, %154 : vector<64x32xf32>
    %156 = arith.addf %135, %155 : vector<64x32xf32>
    %cst_67 = arith.constant dense<0.000000e+00> : vector<64xf32>
    %157 = vector.multi_reduction <add>, %156, %cst_67 [1] : vector<64x32xf32> to vector<64xf32>
    %158 = vector.shape_cast %157 : vector<64xf32> to vector<64x1xf32>
    %cst_68 = arith.constant 3.200000e+01 : f32
    %159 = vector.broadcast %cst_68 : f32 to vector<64x1xf32>
    %160 = arith.divf %158, %159 : vector<64x1xf32>
    %161 = vector.broadcast %160 : vector<64x1xf32> to vector<64x32xf32>
    %162 = arith.subf %156, %161 : vector<64x32xf32>
    %163 = arith.mulf %162, %162 : vector<64x32xf32>
    %cst_69 = arith.constant dense<0.000000e+00> : vector<64xf32>
    %164 = vector.multi_reduction <add>, %163, %cst_69 [1] : vector<64x32xf32> to vector<64xf32>
    %165 = vector.shape_cast %164 : vector<64xf32> to vector<64x1xf32>
    %cst_70 = arith.constant 3.200000e+01 : f32
    %166 = vector.broadcast %cst_70 : f32 to vector<64x1xf32>
    %167 = arith.divf %165, %166 : vector<64x1xf32>
    %168 = vector.broadcast %160 : vector<64x1xf32> to vector<64x32xf32>
    %169 = arith.subf %156, %168 : vector<64x32xf32>
    %cst_71 = arith.constant 9.99999974E-6 : f32
    %170 = vector.broadcast %cst_71 : f32 to vector<64x1xf32>
    %171 = arith.addf %167, %170 : vector<64x1xf32>
    %172 = math.rsqrt %171 : vector<64x1xf32>
    %173 = vector.broadcast %172 : vector<64x1xf32> to vector<64x32xf32>
    %174 = arith.mulf %169, %173 : vector<64x32xf32>
    %c0_72 = arith.constant 0 : index
    %c0_73 = arith.constant 0 : index
    %175 = vector.load %arg12[%c0_72, %c0_73] : memref<32x128xbf16, #tpu.memory_space<vmem>>, vector<32x128xbf16>
    %176 = arith.truncf %174 : vector<64x32xf32> to vector<64x32xbf16>
    %cst_74 = arith.constant dense<0.000000e+00> : vector<64x128xf32>
    %177 = tpu.matmul %176, %175, %cst_74 {dimension_numbers = #tpu.dot_dimension_numbers<[1], [0], [0], [1], [0, 0, 1, 1], [], []>} : vector<64x32xbf16>, vector<32x128xbf16>, vector<64x128xf32> -> vector<64x128xf32>
    %c0_75 = arith.constant 0 : index
    %c0_76 = arith.constant 0 : index
    %178 = vector.load %arg13[%c0_75, %c0_76] : memref<1x128xf32, #tpu.memory_space<vmem>>, vector<1x128xf32>
    %179 = vector.broadcast %178 : vector<1x128xf32> to vector<64x128xf32>
    %180 = arith.addf %177, %179 : vector<64x128xf32>
    %181 = tpu.iota {dimensions = array<i32: 1>} : vector<1x128xi32>
    %182 = arith.sitofp %181 : vector<1x128xi32> to vector<1x128xf32>
    %cst_77 = arith.constant 5.000000e-01 : f32
    %183 = vector.broadcast %cst_77 : f32 to vector<1x128xf32>
    %184 = arith.addf %182, %183 : vector<1x128xf32>
    %cst_78 = arith.constant 6.250000e-02 : f32
    %185 = vector.broadcast %cst_78 : f32 to vector<1x128xf32>
    %186 = arith.mulf %184, %185 : vector<1x128xf32>
    %187 = math.floor %186 : vector<1x128xf32>
    %cst_79 = arith.constant 1.600000e+01 : f32
    %188 = vector.broadcast %cst_79 : f32 to vector<1x128xf32>
    %189 = arith.mulf %187, %188 : vector<1x128xf32>
    %190 = arith.subf %182, %189 : vector<1x128xf32>
    %191 = vector.broadcast %190 : vector<1x128xf32> to vector<64x128xf32>
    %192 = arith.subf %86, %191 : vector<64x128xf32>
    %193 = math.absf %192 : vector<64x128xf32>
    %cst_80 = arith.constant 5.000000e-01 : f32
    %194 = vector.broadcast %cst_80 : f32 to vector<64x128xf32>
    %195 = arith.cmpf olt, %193, %194 : vector<64x128xf32>
    %196 = arith.extui %195 : vector<64x128xi1> to vector<64x128xi32>
    %197 = arith.sitofp %196 : vector<64x128xi32> to vector<64x128xf32>
    %198 = arith.addf %180, %197 : vector<64x128xf32>
    %c0_81 = arith.constant 0 : index
    %c0_82 = arith.constant 0 : index
    %199 = vector.load %arg14[%c0_81, %c0_82] : memref<64x128xf32, #tpu.memory_space<vmem>>, vector<64x128xf32>
    tpu.vector_store %arg14[%c0_81, %c0_82], %198 {strides = array<i32>} : memref<64x128xf32, #tpu.memory_space<vmem>>, vector<64x128xf32>,
    return
  }
  func.func @transform_0(%arg0: i32) -> (i32, i32) {
    %c0_i32 = arith.constant 0 : i32
    %c0_i32_0 = arith.constant 0 : i32
    return %arg0, %c0_i32 : i32, i32
  }
  func.func @transform_1(%arg0: i32) -> (i32, i32) {
    %c0_i32 = arith.constant 0 : i32
    %c0_i32_0 = arith.constant 0 : i32
    return %arg0, %c0_i32 : i32, i32
  }
  func.func @transform_2(%arg0: i32) -> (i32, i32) {
    %c0_i32 = arith.constant 0 : i32
    %c0_i32_0 = arith.constant 0 : i32
    %c0_i32_1 = arith.constant 0 : i32
    return %c0_i32, %c0_i32_0 : i32, i32
  }
  func.func @transform_3(%arg0: i32) -> (i32, i32) {
    %c0_i32 = arith.constant 0 : i32
    %c0_i32_0 = arith.constant 0 : i32
    %c0_i32_1 = arith.constant 0 : i32
    return %c0_i32, %c0_i32_0 : i32, i32
  }
  func.func @transform_4(%arg0: i32) -> (i32, i32) {
    %c0_i32 = arith.constant 0 : i32
    %c0_i32_0 = arith.constant 0 : i32
    %c0_i32_1 = arith.constant 0 : i32
    return %c0_i32, %c0_i32_0 : i32, i32
  }
  func.func @transform_5(%arg0: i32) -> (i32, i32) {
    %c0_i32 = arith.constant 0 : i32
    %c0_i32_0 = arith.constant 0 : i32
    %c0_i32_1 = arith.constant 0 : i32
    return %c0_i32, %c0_i32_0 : i32, i32
  }
  func.func @transform_6(%arg0: i32) -> (i32, i32) {
    %c0_i32 = arith.constant 0 : i32
    %c0_i32_0 = arith.constant 0 : i32
    %c0_i32_1 = arith.constant 0 : i32
    return %c0_i32, %c0_i32_0 : i32, i32
  }
  func.func @transform_7(%arg0: i32) -> (i32, i32) {
    %c0_i32 = arith.constant 0 : i32
    %c0_i32_0 = arith.constant 0 : i32
    %c0_i32_1 = arith.constant 0 : i32
    return %c0_i32, %c0_i32_0 : i32, i32
  }
  func.func @transform_8(%arg0: i32) -> (i32, i32, i32) {
    %c0_i32 = arith.constant 0 : i32
    %c0_i32_0 = arith.constant 0 : i32
    %c0_i32_1 = arith.constant 0 : i32
    %c0_i32_2 = arith.constant 0 : i32
    return %c0_i32, %c0_i32_0, %c0_i32_1 : i32, i32, i32
  }
  func.func @transform_9(%arg0: i32) -> (i32, i32, i32) {
    %c0_i32 = arith.constant 0 : i32
    %c0_i32_0 = arith.constant 0 : i32
    %c0_i32_1 = arith.constant 0 : i32
    %c0_i32_2 = arith.constant 0 : i32
    return %c0_i32, %c0_i32_0, %c0_i32_1 : i32, i32, i32
  }
  func.func @transform_10(%arg0: i32) -> (i32, i32, i32) {
    %c0_i32 = arith.constant 0 : i32
    %c0_i32_0 = arith.constant 0 : i32
    %c0_i32_1 = arith.constant 0 : i32
    %c0_i32_2 = arith.constant 0 : i32
    return %c0_i32, %c0_i32_0, %c0_i32_1 : i32, i32, i32
  }
  func.func @transform_11(%arg0: i32) -> (i32, i32) {
    %c0_i32 = arith.constant 0 : i32
    %c0_i32_0 = arith.constant 0 : i32
    %c0_i32_1 = arith.constant 0 : i32
    return %c0_i32, %c0_i32_0 : i32, i32
  }
  func.func @transform_12(%arg0: i32) -> (i32, i32) {
    %c0_i32 = arith.constant 0 : i32
    %c0_i32_0 = arith.constant 0 : i32
    %c0_i32_1 = arith.constant 0 : i32
    return %c0_i32, %c0_i32_0 : i32, i32
  }
  func.func @transform_13(%arg0: i32) -> (i32, i32) {
    %c0_i32 = arith.constant 0 : i32
    %c0_i32_0 = arith.constant 0 : i32
    return %arg0, %c0_i32 : i32, i32
  }
}

</mosaic_0001>

<llo_original>
// kernel: tpu_custom_call.1
$region0: #{tpu_custom_call.1}
  #allocation0 [shape = 'u32[]', space=smem, size = 0x4, offset = 0x4, fixed_abs, tag = 'smem constant byte address 0x4 - core index']
  #allocation1 [shape = 'u32[144,128]{1,0:T(1,128)}', space=vmem, size = 0x12000, scoped, tag = 'internal scratch']
  %s0 = inlined_call_operand.vmem [shape: s32[256,8], index: 0, kind: input, shape index: {}]
  %s1 = inlined_call_operand.vmem [shape: f32[256,1], index: 1, kind: input, shape index: {}]
  %s2 = inlined_call_operand.vmem [shape: f32[1,32], index: 2, kind: input, shape index: {}]
  %s3 = inlined_call_operand.vmem [shape: bf16[32,64], index: 3, kind: input, shape index: {}]
  %s4 = inlined_call_operand.vmem [shape: f32[1,64], index: 4, kind: input, shape index: {}]
  %s5 = inlined_call_operand.vmem [shape: bf16[64,128], index: 5, kind: input, shape index: {}]
  %s6 = inlined_call_operand.vmem [shape: bf16[8,160], index: 6, kind: input, shape index: {}]
  %s7 = inlined_call_operand.vmem [shape: f32[1,32], index: 7, kind: input, shape index: {}]
  %s8 = inlined_call_operand.vmem [shape: bf16[2,32,64], index: 8, kind: input, shape index: {}]
  %s9 = inlined_call_operand.vmem [shape: bf16[2,64,32], index: 9, kind: input, shape index: {}]
  %s10 = inlined_call_operand.vmem [shape: f32[2,4,128], index: 10, kind: input, shape index: {}]
  %s11 = inlined_call_operand.vmem [shape: bf16[32,128], index: 11, kind: input, shape index: {}]
  %s12 = inlined_call_operand.vmem [shape: f32[1,128], index: 12, kind: input, shape index: {}]
  %s13 = inlined_call_operand.hbm [shape: f32[256,128], index: 13, kind: output, shape index: {}]
  %s14 = sld [smem:[#allocation0]]
  $region85: #{tpu_custom_call.1} parent=0
    _
  %s16 = ssub.s32 1, %s14
  %s17 = scalar_select 0, %s16, %s14
  $region1: #{tpu_custom_call.1} parent=0
    #allocation2 [shape = 'u8[65536]{0}', space=vmem, size = 0x10000, scoped, tag = 'output window, operand 0']
    #allocation3 [shape = 's32[2]{0}', space=sflag, size = 0x8, scoped, tag = 'scoped memory for tpu_custom_call.1']
    %18 = vsyncpa [#allocation3], 0
    %s19 = scalar_lea.sflag [#allocation3], 1
    %20 = vsyncpa %s19, 0
    loop: start=0, step=1, limit=6
    $region2: #{tpu_custom_call.1} parent=1 // loop_pre_header
      _
    $region3: #{tpu_custom_call.1} parent=1 // loop_header
      %s22 = sphi 0, %s26
      %p23 = scmp.ge.s32.totalorder %s22, 6
      %s32 = sphi 0, %s34
      %s35 = sphi 0, %s32
      %s36 = sphi 0, %s35
      %s52 = sphi 0, %s36
      %s58 = sphi 0, %s60
      %s61 = sphi 0, %s58
      %s62 = sphi 0, %s61
      %s78 = sphi 0, %s62
      %s82 = sphi 0, %s82
      %s84 = sphi 0, %s82
      %s85 = sphi 0, %s84
      %s99 = sphi 0, %s85
      %s103 = sphi 0, %s103
      %s105 = sphi 0, %s103
      %s106 = sphi 0, %s105
      %s120 = sphi 0, %s106
      %s124 = sphi 0, %s124
      %s126 = sphi 0, %s124
      %s127 = sphi 0, %s126
      %s141 = sphi 0, %s127
      %s145 = sphi 0, %s145
      %s147 = sphi 0, %s145
      %s148 = sphi 0, %s147
      %s162 = sphi 0, %s148
      %s166 = sphi 0, %s166
      %s168 = sphi 0, %s166
      %s169 = sphi 0, %s168
      %s183 = sphi 0, %s169
      %s187 = sphi 0, %s187
      %s189 = sphi 0, %s187
      %s190 = sphi 0, %s189
      %s204 = sphi 0, %s190
      %s208 = sphi 0, %s208
      %s210 = sphi 0, %s208
      %s211 = sphi 0, %s210
      %s225 = sphi 0, %s211
      %s229 = sphi 0, %s229
      %s231 = sphi 0, %s229
      %s232 = sphi 0, %s231
      %s246 = sphi 0, %s232
      %s250 = sphi 0, %s250
      %s252 = sphi 0, %s250
      %s253 = sphi 0, %s252
      %s267 = sphi 0, %s253
      %s271 = sphi 0, %s271
      %s273 = sphi 0, %s271
      %s274 = sphi 0, %s273
      %s288 = sphi 0, %s274
      %s292 = sphi 0, %s292
      %s294 = sphi 0, %s292
      %s295 = sphi 0, %s294
      %s309 = sphi 0, %s295
      %s315 = sphi 0, %s317
      %s318 = sphi 0, %s315
      %s319 = sphi 0, %s318
      %s335 = sphi 0, %s319
    $region4: #{tpu_custom_call.1} parent=1 // loop_header_branch
      %25 = sbr.rel (%p23) target = $region8
    $region5: #{tpu_custom_call.1} parent=1 // loop_body
      %s27 = ssub.s32 %s22, 1
      %s28 = ssub.s32 %s22, 2
      %s29 = sadd.s32 %s22, 1
      %s30 = ssub.s32 %s22, %s29
      %p31 = scmp.eq.s32.totalorder %s30, 0
      %s33 = sadd.s32 %s32, 1
      %s34 = scalar_select %p31, %s32, %s33
      %p37 = pneg %p31
      %p38 = scmp.eq.s32.totalorder %s22, 3
      %p39 = por %p37, %p38
      %p40 = scmp.ne.s32.totalorder %s32, %s35
      %p41 = scmp.eq.s32.totalorder %s22, 0
      %p42 = por %p40, %p41
      %p43 = scmp.ne.s32.totalorder %s32, %s35
      %p44 = scmp.eq.s32.totalorder %s27, 3
      %p45 = por %p43, %p44
      %p46 = scmp.ne.s32.totalorder %s35, %s36
      %p47 = scmp.eq.s32.totalorder %s27, 0
      %p48 = por %p46, %p47
      %p49 = scmp.ne.s32.totalorder %s35, %s36
      %p50 = scmp.eq.s32.totalorder %s28, 3
      %p51 = por %p49, %p50
      %p53 = scmp.ne.s32.totalorder %s36, %s52
      %p54 = scmp.eq.s32.totalorder %s28, 0
      %p55 = por %p53, %p54
      %s56 = ssub.s32 %s22, %s29
      %p57 = scmp.eq.s32.totalorder %s56, 0
      %s59 = sadd.s32 %s58, 1
      %s60 = scalar_select %p57, %s58, %s59
      %p63 = pneg %p57
      %p64 = scmp.eq.s32.totalorder %s22, 3
      %p65 = por %p63, %p64
      %p66 = scmp.ne.s32.totalorder %s58, %s61
      %p67 = scmp.eq.s32.totalorder %s22, 0
      %p68 = por %p66, %p67
      %p69 = scmp.ne.s32.totalorder %s58, %s61
      %p70 = scmp.eq.s32.totalorder %s27, 3
      %p71 = por %p69, %p70
      %p72 = scmp.ne.s32.totalorder %s61, %s62
      %p73 = scmp.eq.s32.totalorder %s27, 0
      %p74 = por %p72, %p73
      %p75 = scmp.ne.s32.totalorder %s61, %s62
      %p76 = scmp.eq.s32.totalorder %s28, 3
      %p77 = por %p75, %p76
      %p79 = scmp.ne.s32.totalorder %s62, %s78
      %p80 = scmp.eq.s32.totalorder %s28, 0
      %p81 = por %p79, %p80
      %s83 = sadd.s32 %s82, 1
      %p86 = scmp.eq.s32.totalorder %s22, 3
      %p87 = scmp.ne.s32.totalorder %s82, %s84
      %p88 = scmp.eq.s32.totalorder %s22, 0
      %p89 = por %p87, %p88
      %p90 = scmp.ne.s32.totalorder %s82, %s84
      %p91 = scmp.eq.s32.totalorder %s27, 3
      %p92 = por %p90, %p91
      %p93 = scmp.ne.s32.totalorder %s84, %s85
      %p94 = scmp.eq.s32.totalorder %s27, 0
      %p95 = por %p93, %p94
      %p96 = scmp.ne.s32.totalorder %s84, %s85
      %p97 = scmp.eq.s32.totalorder %s28, 3
      %p98 = por %p96, %p97
      %p100 = scmp.ne.s32.totalorder %s85, %s99
      %p101 = scmp.eq.s32.totalorder %s28, 0
      %p102 = por %p100, %p101
      %s104 = sadd.s32 %s103, 1
      %p107 = scmp.eq.s32.totalorder %s22, 3
      %p108 = scmp.ne.s32.totalorder %s103, %s105
      %p109 = scmp.eq.s32.totalorder %s22, 0
      %p110 = por %p108, %p109
      %p111 = scmp.ne.s32.totalorder %s103, %s105
      %p112 = scmp.eq.s32.totalorder %s27, 3
      %p113 = por %p111, %p112
      %p114 = scmp.ne.s32.totalorder %s105, %s106
      %p115 = scmp.eq.s32.totalorder %s27, 0
      %p116 = por %p114, %p115
      %p117 = scmp.ne.s32.totalorder %s105, %s106
      %p118 = scmp.eq.s32.totalorder %s28, 3
      %p119 = por %p117, %p118
      %p121 = scmp.ne.s32.totalorder %s106, %s120
      %p122 = scmp.eq.s32.totalorder %s28, 0
      %p123 = por %p121, %p122
      %s125 = sadd.s32 %s124, 1
      %p128 = scmp.eq.s32.totalorder %s22, 3
      %p129 = scmp.ne.s32.totalorder %s124, %s126
      %p130 = scmp.eq.s32.totalorder %s22, 0
      %p131 = por %p129, %p130
      %p132 = scmp.ne.s32.totalorder %s124, %s126
      %p133 = scmp.eq.s32.totalorder %s27, 3
      %p134 = por %p132, %p133
      %p135 = scmp.ne.s32.totalorder %s126, %s127
      %p136 = scmp.eq.s32.totalorder %s27, 0
      %p137 = por %p135, %p136
      %p138 = scmp.ne.s32.totalorder %s126, %s127
      %p139 = scmp.eq.s32.totalorder %s28, 3
      %p140 = por %p138, %p139
      %p142 = scmp.ne.s32.totalorder %s127, %s141
      %p143 = scmp.eq.s32.totalorder %s28, 0
      %p144 = por %p142, %p143
      %s146 = sadd.s32 %s145, 1
      %p149 = scmp.eq.s32.totalorder %s22, 3
      %p150 = scmp.ne.s32.totalorder %s145, %s147
      %p151 = scmp.eq.s32.totalorder %s22, 0
      %p152 = por %p150, %p151
      %p153 = scmp.ne.s32.totalorder %s145, %s147
      %p154 = scmp.eq.s32.totalorder %s27, 3
      %p155 = por %p153, %p154
      %p156 = scmp.ne.s32.totalorder %s147, %s148
      %p157 = scmp.eq.s32.totalorder %s27, 0
      %p158 = por %p156, %p157
      %p159 = scmp.ne.s32.totalorder %s147, %s148
      %p160 = scmp.eq.s32.totalorder %s28, 3
      %p161 = por %p159, %p160
      %p163 = scmp.ne.s32.totalorder %s148, %s162
      %p164 = scmp.eq.s32.totalorder %s28, 0
      %p165 = por %p163, %p164
      %s167 = sadd.s32 %s166, 1
      %p170 = scmp.eq.s32.totalorder %s22, 3
      %p171 = scmp.ne.s32.totalorder %s166, %s168
      %p172 = scmp.eq.s32.totalorder %s22, 0
      %p173 = por %p171, %p172
      %p174 = scmp.ne.s32.totalorder %s166, %s168
      %p175 = scmp.eq.s32.totalorder %s27, 3
      %p176 = por %p174, %p175
      %p177 = scmp.ne.s32.totalorder %s168, %s169
      %p178 = scmp.eq.s32.totalorder %s27, 0
      %p179 = por %p177, %p178
      %p180 = scmp.ne.s32.totalorder %s168, %s169
      %p181 = scmp.eq.s32.totalorder %s28, 3
      %p182 = por %p180, %p181
      %p184 = scmp.ne.s32.totalorder %s169, %s183
      %p185 = scmp.eq.s32.totalorder %s28, 0
      %p186 = por %p184, %p185
      %s188 = sadd.s32 %s187, 1
      %p191 = scmp.eq.s32.totalorder %s22, 3
      %p192 = scmp.ne.s32.totalorder %s187, %s189
      %p193 = scmp.eq.s32.totalorder %s22, 0
      %p194 = por %p192, %p193
      %p195 = scmp.ne.s32.totalorder %s187, %s189
      %p196 = scmp.eq.s32.totalorder %s27, 3
      %p197 = por %p195, %p196
      %p198 = scmp.ne.s32.totalorder %s189, %s190
      %p199 = scmp.eq.s32.totalorder %s27, 0
      %p200 = por %p198, %p199
      %p201 = scmp.ne.s32.totalorder %s189, %s190
      %p202 = scmp.eq.s32.totalorder %s28, 3
      %p203 = por %p201, %p202
      %p205 = scmp.ne.s32.totalorder %s190, %s204
      %p206 = scmp.eq.s32.totalorder %s28, 0
      %p207 = por %p205, %p206
      %s209 = sadd.s32 %s208, 1
      %p212 = scmp.eq.s32.totalorder %s22, 3
      %p213 = scmp.ne.s32.totalorder %s208, %s210
      %p214 = scmp.eq.s32.totalorder %s22, 0
      %p215 = por %p213, %p214
      %p216 = scmp.ne.s32.totalorder %s208, %s210
      %p217 = scmp.eq.s32.totalorder %s27, 3
      %p218 = por %p216, %p217
      %p219 = scmp.ne.s32.totalorder %s210, %s211
      %p220 = scmp.eq.s32.totalorder %s27, 0
      %p221 = por %p219, %p220
      %p222 = scmp.ne.s32.totalorder %s210, %s211
      %p223 = scmp.eq.s32.totalorder %s28, 3
      %p224 = por %p222, %p223
      %p226 = scmp.ne.s32.totalorder %s211, %s225
      %p227 = scmp.eq.s32.totalorder %s28, 0
      %p228 = por %p226, %p227
      %s230 = sadd.s32 %s229, 1
      %p233 = scmp.eq.s32.totalorder %s22, 3
      %p234 = scmp.ne.s32.totalorder %s229, %s231
      %p235 = scmp.eq.s32.totalorder %s22, 0
      %p236 = por %p234, %p235
      %p237 = scmp.ne.s32.totalorder %s229, %s231
      %p238 = scmp.eq.s32.totalorder %s27, 3
      %p239 = por %p237, %p238
      %p240 = scmp.ne.s32.totalorder %s231, %s232
      %p241 = scmp.eq.s32.totalorder %s27, 0
      %p242 = por %p240, %p241
      %p243 = scmp.ne.s32.totalorder %s231, %s232
      %p244 = scmp.eq.s32.totalorder %s28, 3
      %p245 = por %p243, %p244
      %p247 = scmp.ne.s32.totalorder %s232, %s246
      %p248 = scmp.eq.s32.totalorder %s28, 0
      %p249 = por %p247, %p248
      %s251 = sadd.s32 %s250, 1
      %p254 = scmp.eq.s32.totalorder %s22, 3
      %p255 = scmp.ne.s32.totalorder %s250, %s252
      %p256 = scmp.eq.s32.totalorder %s22, 0
      %p257 = por %p255, %p256
      %p258 = scmp.ne.s32.totalorder %s250, %s252
      %p259 = scmp.eq.s32.totalorder %s27, 3
      %p260 = por %p258, %p259
      %p261 = scmp.ne.s32.totalorder %s252, %s253
      %p262 = scmp.eq.s32.totalorder %s27, 0
      %p263 = por %p261, %p262
      %p264 = scmp.ne.s32.totalorder %s252, %s253
      %p265 = scmp.eq.s32.totalorder %s28, 3
      %p266 = por %p264, %p265
      %p268 = scmp.ne.s32.totalorder %s253, %s267
      %p269 = scmp.eq.s32.totalorder %s28, 0
      %p270 = por %p268, %p269
      %s272 = sadd.s32 %s271, 1
      %p275 = scmp.eq.s32.totalorder %s22, 3
      %p276 = scmp.ne.s32.totalorder %s271, %s273
      %p277 = scmp.eq.s32.totalorder %s22, 0
      %p278 = por %p276, %p277
      %p279 = scmp.ne.s32.totalorder %s271, %s273
      %p280 = scmp.eq.s32.totalorder %s27, 3
      %p281 = por %p279, %p280
      %p282 = scmp.ne.s32.totalorder %s273, %s274
      %p283 = scmp.eq.s32.totalorder %s27, 0
      %p284 = por %p282, %p283
      %p285 = scmp.ne.s32.totalorder %s273, %s274
      %p286 = scmp.eq.s32.totalorder %s28, 3
      %p287 = por %p285, %p286
      %p289 = scmp.ne.s32.totalorder %s274, %s288
      %p290 = scmp.eq.s32.totalorder %s28, 0
      %p291 = por %p289, %p290
      %s293 = sadd.s32 %s292, 1
      %p296 = scmp.eq.s32.totalorder %s22, 3
      %p297 = scmp.ne.s32.totalorder %s292, %s294
      %p298 = scmp.eq.s32.totalorder %s22, 0
      %p299 = por %p297, %p298
      %p300 = scmp.ne.s32.totalorder %s292, %s294
      %p301 = scmp.eq.s32.totalorder %s27, 3
      %p302 = por %p300, %p301
      %p303 = scmp.ne.s32.totalorder %s294, %s295
      %p304 = scmp.eq.s32.totalorder %s27, 0
      %p305 = por %p303, %p304
      %p306 = scmp.ne.s32.totalorder %s294, %s295
      %p307 = scmp.eq.s32.totalorder %s28, 3
      %p308 = por %p306, %p307
      %p310 = scmp.ne.s32.totalorder %s295, %s309
      %p311 = scmp.eq.s32.totalorder %s28, 0
      %p312 = por %p310, %p311
      %s313 = ssub.s32 %s22, %s29
      %p314 = scmp.eq.s32.totalorder %s313, 0
      %s316 = sadd.s32 %s315, 1
      %s317 = scalar_select %p314, %s315, %s316
      %p320 = pneg %p314
      %p321 = scmp.eq.s32.totalorder %s22, 3
      %p322 = por %p320, %p321
      %p323 = scmp.ne.s32.totalorder %s315, %s318
      %p324 = scmp.eq.s32.totalorder %s22, 0
      %p325 = por %p323, %p324
      %p326 = scmp.ne.s32.totalorder %s315, %s318
      %p327 = scmp.eq.s32.totalorder %s27, 3
      %p328 = por %p326, %p327
      %p329 = scmp.ne.s32.totalorder %s318, %s319
      %p330 = scmp.eq.s32.totalorder %s27, 0
      %p331 = por %p329, %p330
      %p332 = scmp.ne.s32.totalorder %s318, %s319
      %p333 = scmp.eq.s32.totalorder %s28, 3
      %p334 = por %p332, %p333
      %p336 = scmp.ne.s32.totalorder %s319, %s335
      %p337 = scmp.eq.s32.totalorder %s28, 0
      %p338 = por %p336, %p337
      %p339 = scmp.le.s32.totalorder 1, %s22
      %p340 = scmp.lt.s32.totalorder %s22, 5
      %p341 = pnand %p339, %p340
      %p342 = pneg %p341
      // Predicated region
      $region9: #{tpu_custom_call.1} parent=5 // pred_check
        _
      $region10: #{tpu_custom_call.1} parent=5 // pred_check_branch
        %344 = sbr.rel (%p341) target = $region12
      $region11: #{tpu_custom_call.1} parent=5 // pred_region
        %s345 = ssub.s32 %s22, 1
        // Predicated region
        $region13: #{tpu_custom_call.1} parent=11 // pred_check
          %p346 = pneg %p95
        $region14: #{tpu_custom_call.1} parent=11 // pred_check_branch
          %348 = sbr.rel (%p346) target = $region16
        $region15: #{tpu_custom_call.1} parent=11 // pred_region
          _
        $region16: #{tpu_custom_call.1} parent=11 // pred_fallthru
          _
        // Predicated region
        $region17: #{tpu_custom_call.1} parent=11 // pred_check
          %p349 = pneg %p116
        $region18: #{tpu_custom_call.1} parent=11 // pred_check_branch
          %351 = sbr.rel (%p349) target = $region20
        $region19: #{tpu_custom_call.1} parent=11 // pred_region
          _
        $region20: #{tpu_custom_call.1} parent=11 // pred_fallthru
          _
        // Predicated region
        $region21: #{tpu_custom_call.1} parent=11 // pred_check
          %p352 = pneg %p137
        $region22: #{tpu_custom_call.1} parent=11 // pred_check_branch
          %354 = sbr.rel (%p352) target = $region24
        $region23: #{tpu_custom_call.1} parent=11 // pred_region
          _
        $region24: #{tpu_custom_call.1} parent=11 // pred_fallthru
          _
        // Predicated region
        $region25: #{tpu_custom_call.1} parent=11 // pred_check
          %p355 = pneg %p158
        $region26: #{tpu_custom_call.1} parent=11 // pred_check_branch
          %357 = sbr.rel (%p355) target = $region28
        $region27: #{tpu_custom_call.1} parent=11 // pred_region
          _
        $region28: #{tpu_custom_call.1} parent=11 // pred_fallthru
          _
        // Predicated region
        $region29: #{tpu_custom_call.1} parent=11 // pred_check
          %p358 = pneg %p179
        $region30: #{tpu_custom_call.1} parent=11 // pred_check_branch
          %360 = sbr.rel (%p358) target = $region32
        $region31: #{tpu_custom_call.1} parent=11 // pred_region
          _
        $region32: #{tpu_custom_call.1} parent=11 // pred_fallthru
          _
        // Predicated region
        $region33: #{tpu_custom_call.1} parent=11 // pred_check
          %p361 = pneg %p200
        $region34: #{tpu_custom_call.1} parent=11 // pred_check_branch
          %363 = sbr.rel (%p361) target = $region36
        $region35: #{tpu_custom_call.1} parent=11 // pred_region
          _
        $region36: #{tpu_custom_call.1} parent=11 // pred_fallthru
          _
        // Predicated region
        $region37: #{tpu_custom_call.1} parent=11 // pred_check
          %p364 = pneg %p221
        $region38: #{tpu_custom_call.1} parent=11 // pred_check_branch
          %366 = sbr.rel (%p364) target = $region40
        $region39: #{tpu_custom_call.1} parent=11 // pred_region
          _
        $region40: #{tpu_custom_call.1} parent=11 // pred_fallthru
          _
        // Predicated region
        $region41: #{tpu_custom_call.1} parent=11 // pred_check
          %p367 = pneg %p242
        $region42: #{tpu_custom_call.1} parent=11 // pred_check_branch
          %369 = sbr.rel (%p367) target = $region44
        $region43: #{tpu_custom_call.1} parent=11 // pred_region
          _
        $region44: #{tpu_custom_call.1} parent=11 // pred_fallthru
          _
        // Predicated region
        $region45: #{tpu_custom_call.1} parent=11 // pred_check
          %p370 = pneg %p263
        $region46: #{tpu_custom_call.1} parent=11 // pred_check_branch
          %372 = sbr.rel (%p370) target = $region48
        $region47: #{tpu_custom_call.1} parent=11 // pred_region
          _
        $region48: #{tpu_custom_call.1} parent=11 // pred_fallthru
          _
        // Predicated region
        $region49: #{tpu_custom_call.1} parent=11 // pred_check
          %p373 = pneg %p284
        $region50: #{tpu_custom_call.1} parent=11 // pred_check_branch
          %375 = sbr.rel (%p373) target = $region52
        $region51: #{tpu_custom_call.1} parent=11 // pred_region
          _
        $region52: #{tpu_custom_call.1} parent=11 // pred_fallthru
          _
        // Predicated region
        $region53: #{tpu_custom_call.1} parent=11 // pred_check
          %p376 = pneg %p305
        $region54: #{tpu_custom_call.1} parent=11 // pred_check_branch
          %378 = sbr.rel (%p376) target = $region56
        $region55: #{tpu_custom_call.1} parent=11 // pred_region
          _
        $region56: #{tpu_custom_call.1} parent=11 // pred_fallthru
          _
      $region12: #{tpu_custom_call.1} parent=5 // pred_fallthru
        _
      %p379 = scmp.lt.s32.totalorder %s22, 4
      // Predicated region
      $region57: #{tpu_custom_call.1} parent=5 // pred_check
        %p380 = pneg %p379
      $region58: #{tpu_custom_call.1} parent=5 // pred_check_branch
        %382 = sbr.rel (%p380) target = $region60
      $region59: #{tpu_custom_call.1} parent=5 // pred_region
        // Predicated region
        $region61: #{tpu_custom_call.1} parent=59 // pred_check
          %p383 = pneg %p42
        $region62: #{tpu_custom_call.1} parent=59 // pred_check_branch
          %385 = sbr.rel (%p383) target = $region64
        $region63: #{tpu_custom_call.1} parent=59 // pred_region
          %s386 = smul.u32 8, %s22
          %p387 = scmp.lt.s32.totalorder %s386, 31
          %s388 = scalar_select %p387, %s386, 31
          %s389 = smul.addr %s388, 8
          %s390 = scalar_lea.vmem %s0, %s389
          %s391 = smul.u32 8, %s22
        $region64: #{tpu_custom_call.1} parent=59 // pred_fallthru
          _
        // Predicated region
        $region65: #{tpu_custom_call.1} parent=59 // pred_check
          %p392 = pneg %p68
        $region66: #{tpu_custom_call.1} parent=59 // pred_check_branch
          %394 = sbr.rel (%p392) target = $region68
        $region67: #{tpu_custom_call.1} parent=59 // pred_region
          %s395 = smul.u32 8, %s22
          %p396 = scmp.lt.s32.totalorder %s395, 31
          %s397 = scalar_select %p396, %s395, 31
          %s398 = smul.addr %s397, 8
          %s399 = scalar_lea.vmem %s1, %s398
          %s400 = smul.u32 8, %s22
        $region68: #{tpu_custom_call.1} parent=59 // pred_fallthru
          _
      $region60: #{tpu_custom_call.1} parent=5 // pred_fallthru
        _
      %p401 = scmp.le.s32.totalorder 1, %s22
      %p402 = scmp.lt.s32.totalorder %s22, 5
      %p403 = pnand %p401, %p402
      %p404 = pneg %p403
      // Predicated region
      $region69: #{tpu_custom_call.1} parent=5 // pred_check
        _
      $region70: #{tpu_custom_call.1} parent=5 // pred_check_branch
        %406 = sbr.rel (%p403) target = $region72
      $region71: #{tpu_custom_call.1} parent=5 // pred_region
        %s407 = ssub.s32 %s22, 1
        %s408 = smul.u32 8, %s27
        %p409 = scmp.lt.s32.totalorder %s408, 31
        %s410 = scalar_select %p409, %s408, 31
        %s411 = smul.addr %s410, 8
        %s412 = scalar_lea.vmem %s0, %s411
        %p413 = pneg %p48
        %p414 = pneg %p45
        %s415 = smul.u32 8, %s27
        %p416 = scmp.lt.s32.totalorder %s415, 31
        %s417 = scalar_select %p416, %s415, 31
        %s418 = smul.addr %s417, 8
        %s419 = scalar_lea.vmem %s1, %s418
        %p420 = pneg %p74
        %p421 = pneg %p71
        %p422 = pneg %p95
        %p423 = pneg %p92
        %p424 = pneg %p116
        %p425 = pneg %p113
        %p426 = pneg %p137
        %p427 = pneg %p134
        %p428 = pneg %p158
        %p429 = pneg %p155
        %p430 = pneg %p179
        %p431 = pneg %p176
        %p432 = pneg %p200
        %p433 = pneg %p197
        %p434 = pneg %p221
        %p435 = pneg %p218
        %p436 = pneg %p242
        %p437 = pneg %p239
        %p438 = pneg %p263
        %p439 = pneg %p260
        %p440 = pneg %p284
        %p441 = pneg %p281
        %p442 = pneg %p305
        %p443 = pneg %p302
        %p444 = pneg %p331
        %p445 = pneg %p328
        %s446 = sand.u32 %s318, 1
        %s447 = scalar_lea.sflag [#allocation3], %s446
        %s448 = sand.u32 %s318, 1
        %s449 = smul.addr %s448, 64
        %s450 = scalar_lea.vmem [#allocation2], %s449
        %s451 = smul.u32 8, %s27
        %p452 = scmp.lt.s32.totalorder %s451, 31
        %s453 = scalar_select %p452, %s451, 31
        %s454 = smul.addr %s453, 8
        %s455 = scalar_lea.vmem %s0, %s454
        %s456 = smul.u32 8, %s27
        %s457 = smul.u32 8, %s27
        %p458 = scmp.lt.s32.totalorder %s457, 31
        %s459 = scalar_select %p458, %s457, 31
        %s460 = smul.addr %s459, 8
        %s461 = scalar_lea.vmem %s1, %s460
        %s462 = smul.u32 8, %s27
        %s463 = smul.u32 8, %s27
        %v465 = vld [vmem:[%s461] sm:$0xff]
        %v466 = vld [vmem:[%s461 + $0x8] sm:$0xff]
        %v467 = vld [vmem:[%s461 + $0x10] sm:$0xff]
        %v468 = vld [vmem:[%s461 + $0x18] sm:$0xff]
        %v469 = vld [vmem:[%s461 + $0x20] sm:$0xff]
        %v470 = vld [vmem:[%s461 + $0x28] sm:$0xff]
        %v471 = vld [vmem:[%s461 + $0x30] sm:$0xff]
        %v472 = vld [vmem:[%s461 + $0x38] sm:$0xff]
        %v473 = vmul.f32 %v465, 1000.0
        %v474 = vmul.f32 %v466, 1000.0
        %v475 = vmul.f32 %v467, 1000.0
        %v476 = vmul.f32 %v468, 1000.0
        %v477 = vmul.f32 %v469, 1000.0
        %v478 = vmul.f32 %v470, 1000.0
        %v479 = vmul.f32 %v471, 1000.0
        %v480 = vmul.f32 %v472, 1000.0
        %v481 = vld [vmem:[%s2] sm:$0x1]
        %483 = vset.pattern.permute.xlu0 0
        %484 = vperm.xlu0 %483, %v473
        %v485 = vpop.permute.xlu0 %484
        %488 = vset.pattern.permute.xlu0 0
        %489 = vperm.xlu0 %488, %v474
        %v490 = vpop.permute.xlu0 %489
        %493 = vset.pattern.permute.xlu0 0
        %494 = vperm.xlu0 %493, %v475
        %v495 = vpop.permute.xlu0 %494
        %498 = vset.pattern.permute.xlu0 0
        %499 = vperm.xlu0 %498, %v476
        %v500 = vpop.permute.xlu0 %499
        %503 = vset.pattern.permute.xlu0 0
        %504 = vperm.xlu0 %503, %v477
        %v505 = vpop.permute.xlu0 %504
        %508 = vset.pattern.permute.xlu0 0
        %509 = vperm.xlu0 %508, %v478
        %v510 = vpop.permute.xlu0 %509
        %513 = vset.pattern.permute.xlu0 0
        %514 = vperm.xlu0 %513, %v479
        %v515 = vpop.permute.xlu0 %514
        %518 = vset.pattern.permute.xlu0 0
        %519 = vperm.xlu0 %518, %v480
        %v520 = vpop.permute.xlu0 %519
        %v523 = vlaneseq
        %v524 = vshrl.u32 %v523, 7
        %v525 = vsub.s32 0, %v524
        %v526 = vrot.slane %v481, %v525
        %v528 = vmul.f32 %v485, %v526
        %v529 = vmul.f32 %v490, %v526
        %v530 = vmul.f32 %v495, %v526
        %v531 = vmul.f32 %v500, %v526
        %v532 = vmul.f32 %v505, %v526
        %v533 = vmul.f32 %v510, %v526
        %v534 = vmul.f32 %v515, %v526
        %v535 = vmul.f32 %v520, %v526
        %v536 = vmul.f32 %v528, 0.31830987
        %v537 = vmul.f32 %v529, 0.31830987
        %v538 = vmul.f32 %v530, 0.31830987
        %v539 = vmul.f32 %v531, 0.31830987
        %v540 = vmul.f32 %v532, 0.31830987
        %v541 = vmul.f32 %v533, 0.31830987
        %v542 = vmul.f32 %v534, 0.31830987
        %v543 = vmul.f32 %v535, 0.31830987
        %v544 = vadd.f32 %v536, 0.5
        %v545 = vadd.f32 %v537, 0.5
        %v546 = vadd.f32 %v538, 0.5
        %v547 = vadd.f32 %v539, 0.5
        %v548 = vadd.f32 %v540, 0.5
        %v549 = vadd.f32 %v541, 0.5
        %v550 = vadd.f32 %v542, 0.5
        %v551 = vadd.f32 %v543, 0.5
        %v552 = vfloor.f32 %v544
        %v553 = vfloor.f32 %v545
        %v554 = vfloor.f32 %v546
        %v555 = vfloor.f32 %v547
        %v556 = vfloor.f32 %v548
        %v557 = vfloor.f32 %v549
        %v558 = vfloor.f32 %v550
        %v559 = vfloor.f32 %v551
        %v560 = vmul.f32 %v552, 0.5
        %v561 = vmul.f32 %v553, 0.5
        %v562 = vmul.f32 %v554, 0.5
        %v563 = vmul.f32 %v555, 0.5
        %v564 = vmul.f32 %v556, 0.5
        %v565 = vmul.f32 %v557, 0.5
        %v566 = vmul.f32 %v558, 0.5
        %v567 = vmul.f32 %v559, 0.5
        %v568 = vfloor.f32 %v560
        %v569 = vfloor.f32 %v561
        %v570 = vfloor.f32 %v562
        %v571 = vfloor.f32 %v563
        %v572 = vfloor.f32 %v564
        %v573 = vfloor.f32 %v565
        %v574 = vfloor.f32 %v566
        %v575 = vfloor.f32 %v567
        %v576 = vmul.f32 %v568, 2.0
        %v577 = vmul.f32 %v569, 2.0
        %v578 = vmul.f32 %v570, 2.0
        %v579 = vmul.f32 %v571, 2.0
        %v580 = vmul.f32 %v572, 2.0
        %v581 = vmul.f32 %v573, 2.0
        %v582 = vmul.f32 %v574, 2.0
        %v583 = vmul.f32 %v575, 2.0
        %v584 = vsub.f32 %v552, %v576
        %v585 = vsub.f32 %v553, %v577
        %v586 = vsub.f32 %v554, %v578
        %v587 = vsub.f32 %v555, %v579
        %v588 = vsub.f32 %v556, %v580
        %v589 = vsub.f32 %v557, %v581
        %v590 = vsub.f32 %v558, %v582
        %v591 = vsub.f32 %v559, %v583
        %v592 = vmul.f32 %v584, 2.0
        %v593 = vmul.f32 %v585, 2.0
        %v594 = vmul.f32 %v586, 2.0
        %v595 = vmul.f32 %v587, 2.0
        %v596 = vmul.f32 %v588, 2.0
        %v597 = vmul.f32 %v589, 2.0
        %v598 = vmul.f32 %v590, 2.0
        %v599 = vmul.f32 %v591, 2.0
        %v600 = vsub.f32 1.0, %v592
        %v601 = vsub.f32 1.0, %v593
        %v602 = vsub.f32 1.0, %v594
        %v603 = vsub.f32 1.0, %v595
        %v604 = vsub.f32 1.0, %v596
        %v605 = vsub.f32 1.0, %v597
        %v606 = vsub.f32 1.0, %v598
        %v607 = vsub.f32 1.0, %v599
        %v608 = vmul.f32 %v552, 3.140625
        %v609 = vmul.f32 %v553, 3.140625
        %v610 = vmul.f32 %v554, 3.140625
        %v611 = vmul.f32 %v555, 3.140625
        %v612 = vmul.f32 %v556, 3.140625
        %v613 = vmul.f32 %v557, 3.140625
        %v614 = vmul.f32 %v558, 3.140625
        %v615 = vmul.f32 %v559, 3.140625
        %v616 = vsub.f32 %v528, %v608
        %v617 = vsub.f32 %v529, %v609
        %v618 = vsub.f32 %v530, %v610
        %v619 = vsub.f32 %v531, %v611
        %v620 = vsub.f32 %v532, %v612
        %v621 = vsub.f32 %v533, %v613
        %v622 = vsub.f32 %v534, %v614
        %v623 = vsub.f32 %v535, %v615
        %v624 = vmul.f32 %v552, 0.0009676536
        %v625 = vmul.f32 %v553, 0.0009676536
        %v626 = vmul.f32 %v554, 0.0009676536
        %v627 = vmul.f32 %v555, 0.0009676536
        %v628 = vmul.f32 %v556, 0.0009676536
        %v629 = vmul.f32 %v557, 0.0009676536
        %v630 = vmul.f32 %v558, 0.0009676536
        %v631 = vmul.f32 %v559, 0.0009676536
        %v632 = vsub.f32 %v616, %v624
        %v633 = vsub.f32 %v617, %v625
        %v634 = vsub.f32 %v618, %v626
        %v635 = vsub.f32 %v619, %v627
        %v636 = vsub.f32 %v620, %v628
        %v637 = vsub.f32 %v621, %v629
        %v638 = vsub.f32 %v622, %v630
        %v639 = vsub.f32 %v623, %v631
        %v640 = vmul.f32 %v632, %v632
        %v641 = vmul.f32 %v633, %v633
        %v642 = vmul.f32 %v634, %v634
        %v643 = vmul.f32 %v635, %v635
        %v644 = vmul.f32 %v636, %v636
        %v645 = vmul.f32 %v637, %v637
        %v646 = vmul.f32 %v638, %v638
        %v647 = vmul.f32 %v639, %v639
        %v648 = vmul.f32 %v640, -2.5052108e-08
        %v649 = vmul.f32 %v641, -2.5052108e-08
        %v650 = vmul.f32 %v642, -2.5052108e-08
        %v651 = vmul.f32 %v643, -2.5052108e-08
        %v652 = vmul.f32 %v644, -2.5052108e-08
        %v653 = vmul.f32 %v645, -2.5052108e-08
        %v654 = vmul.f32 %v646, -2.5052108e-08
        %v655 = vmul.f32 %v647, -2.5052108e-08
        %v656 = vadd.f32 %v648, 2.7557319e-06
        %v657 = vadd.f32 %v649, 2.7557319e-06
        %v658 = vadd.f32 %v650, 2.7557319e-06
        %v659 = vadd.f32 %v651, 2.7557319e-06
        %v660 = vadd.f32 %v652, 2.7557319e-06
        %v661 = vadd.f32 %v653, 2.7557319e-06
        %v662 = vadd.f32 %v654, 2.7557319e-06
        %v663 = vadd.f32 %v655, 2.7557319e-06
        %v664 = vmul.f32 %v640, %v656
        %v665 = vmul.f32 %v641, %v657
        %v666 = vmul.f32 %v642, %v658
        %v667 = vmul.f32 %v643, %v659
        %v668 = vmul.f32 %v644, %v660
        %v669 = vmul.f32 %v645, %v661
        %v670 = vmul.f32 %v646, %v662
        %v671 = vmul.f32 %v647, %v663
        %v672 = vadd.f32 %v664, -0.0001984127
        %v673 = vadd.f32 %v665, -0.0001984127
        %v674 = vadd.f32 %v666, -0.0001984127
        %v675 = vadd.f32 %v667, -0.0001984127
        %v676 = vadd.f32 %v668, -0.0001984127
        %v677 = vadd.f32 %v669, -0.0001984127
        %v678 = vadd.f32 %v670, -0.0001984127
        %v679 = vadd.f32 %v671, -0.0001984127
        %v680 = vmul.f32 %v640, %v672
        %v681 = vmul.f32 %v641, %v673
        %v682 = vmul.f32 %v642, %v674
        %v683 = vmul.f32 %v643, %v675
        %v684 = vmul.f32 %v644, %v676
        %v685 = vmul.f32 %v645, %v677
        %v686 = vmul.f32 %v646, %v678
        %v687 = vmul.f32 %v647, %v679
        %v688 = vadd.f32 %v680, 0.008333334
        %v689 = vadd.f32 %v681, 0.008333334
        %v690 = vadd.f32 %v682, 0.008333334
        %v691 = vadd.f32 %v683, 0.008333334
        %v692 = vadd.f32 %v684, 0.008333334
        %v693 = vadd.f32 %v685, 0.008333334
        %v694 = vadd.f32 %v686, 0.008333334
        %v695 = vadd.f32 %v687, 0.008333334
        %v696 = vmul.f32 %v640, %v688
        %v697 = vmul.f32 %v641, %v689
        %v698 = vmul.f32 %v642, %v690
        %v699 = vmul.f32 %v643, %v691
        %v700 = vmul.f32 %v644, %v692
        %v701 = vmul.f32 %v645, %v693
        %v702 = vmul.f32 %v646, %v694
        %v703 = vmul.f32 %v647, %v695
        %v704 = vadd.f32 %v696, -0.16666667
        %v705 = vadd.f32 %v697, -0.16666667
        %v706 = vadd.f32 %v698, -0.16666667
        %v707 = vadd.f32 %v699, -0.16666667
        %v708 = vadd.f32 %v700, -0.16666667
        %v709 = vadd.f32 %v701, -0.16666667
        %v710 = vadd.f32 %v702, -0.16666667
        %v711 = vadd.f32 %v703, -0.16666667
        %v712 = vmul.f32 %v640, %v704
        %v713 = vmul.f32 %v641, %v705
        %v714 = vmul.f32 %v642, %v706
        %v715 = vmul.f32 %v643, %v707
        %v716 = vmul.f32 %v644, %v708
        %v717 = vmul.f32 %v645, %v709
        %v718 = vmul.f32 %v646, %v710
        %v719 = vmul.f32 %v647, %v711
        %v720 = vadd.f32 %v712, 1.0
        %v721 = vadd.f32 %v713, 1.0
        %v722 = vadd.f32 %v714, 1.0
        %v723 = vadd.f32 %v715, 1.0
        %v724 = vadd.f32 %v716, 1.0
        %v725 = vadd.f32 %v717, 1.0
        %v726 = vadd.f32 %v718, 1.0
        %v727 = vadd.f32 %v719, 1.0
        %v728 = vmul.f32 %v632, %v720
        %v729 = vmul.f32 %v633, %v721
        %v730 = vmul.f32 %v634, %v722
        %v731 = vmul.f32 %v635, %v723
        %v732 = vmul.f32 %v636, %v724
        %v733 = vmul.f32 %v637, %v725
        %v734 = vmul.f32 %v638, %v726
        %v735 = vmul.f32 %v639, %v727
        %v736 = vmul.f32 %v640, -2.755732e-07
        %v737 = vmul.f32 %v641, -2.755732e-07
        %v738 = vmul.f32 %v642, -2.755732e-07
        %v739 = vmul.f32 %v643, -2.755732e-07
        %v740 = vmul.f32 %v644, -2.755732e-07
        %v741 = vmul.f32 %v645, -2.755732e-07
        %v742 = vmul.f32 %v646, -2.755732e-07
        %v743 = vmul.f32 %v647, -2.755732e-07
        %v744 = vadd.f32 %v736, 2.4801588e-05
        %v745 = vadd.f32 %v737, 2.4801588e-05
        %v746 = vadd.f32 %v738, 2.4801588e-05
        %v747 = vadd.f32 %v739, 2.4801588e-05
        %v748 = vadd.f32 %v740, 2.4801588e-05
        %v749 = vadd.f32 %v741, 2.4801588e-05
        %v750 = vadd.f32 %v742, 2.4801588e-05
        %v751 = vadd.f32 %v743, 2.4801588e-05
        %v752 = vmul.f32 %v640, %v744
        %v753 = vmul.f32 %v641, %v745
        %v754 = vmul.f32 %v642, %v746
        %v755 = vmul.f32 %v643, %v747
        %v756 = vmul.f32 %v644, %v748
        %v757 = vmul.f32 %v645, %v749
        %v758 = vmul.f32 %v646, %v750
        %v759 = vmul.f32 %v647, %v751
        %v760 = vadd.f32 %v752, -0.0013888889
        %v761 = vadd.f32 %v753, -0.0013888889
        %v762 = vadd.f32 %v754, -0.0013888889
        %v763 = vadd.f32 %v755, -0.0013888889
        %v764 = vadd.f32 %v756, -0.0013888889
        %v765 = vadd.f32 %v757, -0.0013888889
        %v766 = vadd.f32 %v758, -0.0013888889
        %v767 = vadd.f32 %v759, -0.0013888889
        %v768 = vmul.f32 %v640, %v760
        %v769 = vmul.f32 %v641, %v761
        %v770 = vmul.f32 %v642, %v762
        %v771 = vmul.f32 %v643, %v763
        %v772 = vmul.f32 %v644, %v764
        %v773 = vmul.f32 %v645, %v765
        %v774 = vmul.f32 %v646, %v766
        %v775 = vmul.f32 %v647, %v767
        %v776 = vadd.f32 %v768, 0.041666668
        %v777 = vadd.f32 %v769, 0.041666668
        %v778 = vadd.f32 %v770, 0.041666668
        %v779 = vadd.f32 %v771, 0.041666668
        %v780 = vadd.f32 %v772, 0.041666668
        %v781 = vadd.f32 %v773, 0.041666668
        %v782 = vadd.f32 %v774, 0.041666668
        %v783 = vadd.f32 %v775, 0.041666668
        %v784 = vmul.f32 %v640, %v776
        %v785 = vmul.f32 %v641, %v777
        %v786 = vmul.f32 %v642, %v778
        %v787 = vmul.f32 %v643, %v779
        %v788 = vmul.f32 %v644, %v780
        %v789 = vmul.f32 %v645, %v781
        %v790 = vmul.f32 %v646, %v782
        %v791 = vmul.f32 %v647, %v783
        %v792 = vadd.f32 %v784, -0.5
        %v793 = vadd.f32 %v785, -0.5
        %v794 = vadd.f32 %v786, -0.5
        %v795 = vadd.f32 %v787, -0.5
        %v796 = vadd.f32 %v788, -0.5
        %v797 = vadd.f32 %v789, -0.5
        %v798 = vadd.f32 %v790, -0.5
        %v799 = vadd.f32 %v791, -0.5
        %v800 = vmul.f32 %v640, %v792
        %v801 = vmul.f32 %v641, %v793
        %v802 = vmul.f32 %v642, %v794
        %v803 = vmul.f32 %v643, %v795
        %v804 = vmul.f32 %v644, %v796
        %v805 = vmul.f32 %v645, %v797
        %v806 = vmul.f32 %v646, %v798
        %v807 = vmul.f32 %v647, %v799
        %v808 = vadd.f32 %v800, 1.0
        %v809 = vadd.f32 %v801, 1.0
        %v810 = vadd.f32 %v802, 1.0
        %v811 = vadd.f32 %v803, 1.0
        %v812 = vadd.f32 %v804, 1.0
        %v813 = vadd.f32 %v805, 1.0
        %v814 = vadd.f32 %v806, 1.0
        %v815 = vadd.f32 %v807, 1.0
        %v816 = vlaneseq
        %v817 = vand.u32 %v816, 127
        %vm818 = vcmp.lt.s32.totalorder %v817, 16
        %v819 = vmul.f32 %v600, %v728
        %v820 = vmul.f32 %v601, %v729
        %v821 = vmul.f32 %v602, %v730
        %v822 = vmul.f32 %v603, %v731
        %v823 = vmul.f32 %v604, %v732
        %v824 = vmul.f32 %v605, %v733
        %v825 = vmul.f32 %v606, %v734
        %v826 = vmul.f32 %v607, %v735
        %v827 = vmul.f32 %v600, %v808
        %v828 = vmul.f32 %v601, %v809
        %v829 = vmul.f32 %v602, %v810
        %v830 = vmul.f32 %v603, %v811
        %v831 = vmul.f32 %v604, %v812
        %v832 = vmul.f32 %v605, %v813
        %v833 = vmul.f32 %v606, %v814
        %v834 = vmul.f32 %v607, %v815
        %v835 = vsel %vm818, 1, 0
        %vm836 = vcmp.eq.s32.totalorder %v835, 1
        %v837 = vsel %vm836, %v819, %v827
        %v838 = vsel %vm836, %v820, %v828
        %v839 = vsel %vm836, %v821, %v829
        %v840 = vsel %vm836, %v822, %v830
        %v841 = vsel %vm836, %v823, %v831
        %v842 = vsel %vm836, %v824, %v832
        %v843 = vsel %vm836, %v825, %v833
        %v844 = vsel %vm836, %v826, %v834
        %v845 = vld [vmem:[%s3] sm:$0xf]
        %v846 = vld [vmem:[%s3 + $0x4] sm:$0xf]
        %v847 = vld [vmem:[%s3 + $0x8] sm:$0xf]
        %v848 = vld [vmem:[%s3 + $0xc] sm:$0xf]
        %v849 = vpack.c.bf16 %v838, %v837
        %v850 = vpack.c.bf16 %v840, %v839
        %v851 = vpack.c.bf16 %v842, %v841
        %v852 = vpack.c.bf16 %v844, %v843
        %v853 = vld [vmem:[%s4] sm:$0x1]
        %v855 = vlaneseq
        %v856 = vshrl.u32 %v855, 7
        %v857 = vsub.s32 0, %v856
        %v858 = vrot.slane %v853, %v857
        %v864 = vunpack.c.l.b16 %v845
        %v865 = vunpack.c.l.b16 %v846
        %v866 = vunpack.c.l.b16 %v847
        %v867 = vunpack.c.l.b16 %v848
        %v868 = vpack.c.b16 %v865, %v864
        %v869 = vpack.c.b16 %v867, %v866
        %vm872 = vcmask 261120
        %v874 = vsel %vm872, %v849, 0
        %v877 = vsel %vm872, %v850, 0
        %v880 = vsel %vm872, %v851, 0
        %v883 = vsel %vm872, %v852, 0
        %885 = vmatprep.subr.bf16.mxu0 0
        %886 = vmatpush1.bf16.msra.mxu0 %v868
        %887 = vmatprep.subr.bf16.mxu0 0
        %888 = vmatpush1.bf16.msra.mxu0 %v869
        %889 = vmatprep.subr.bf16.mxu0 0
        %890 = vmatpush1.bf16.msra.mxu0 0
        %891 = vmatprep.subr.bf16.mxu0 0
        %892 = vmatpush1.bf16.msra.mxu0 0
        %893 = vmatprep.subr.bf16.mxu0 0
        %894 = vmatpush1.bf16.msra.mxu0 0
        %895 = vmatprep.subr.bf16.mxu0 0
        %896 = vmatpush1.bf16.msra.mxu0 0
        %897 = vmatprep.subr.bf16.mxu0 0
        %898 = vmatpush1.bf16.msra.mxu0 0
        %899 = vmatprep.subr.bf16.mxu0 0
        %900 = vmatpush1.bf16.msra.mxu0 0
        %901 = vmatprep.subr.bf16.mxu0 0
        %902 = vmatpush1.bf16.msra.mxu0 0
        %903 = vmatprep.subr.bf16.mxu0 0
        %904 = vmatpush1.bf16.msra.mxu0 0
        %905 = vmatprep.subr.bf16.mxu0 0
        %906 = vmatpush1.bf16.msra.mxu0 0
        %907 = vmatprep.subr.bf16.mxu0 0
        %908 = vmatpush1.bf16.msra.mxu0 0
        %909 = vmatprep.subr.bf16.mxu0 0
        %910 = vmatpush1.bf16.msra.mxu0 0
        %911 = vmatprep.subr.bf16.mxu0 0
        %912 = vmatpush1.bf16.msra.mxu0 0
        %913 = vmatprep.subr.bf16.mxu0 0
        %914 = vmatpush1.bf16.msra.mxu0 0
        %915 = vmatprep.subr.bf16.mxu0 0
        %916 = vmatpush1.bf16.msra.mxu0 0
        %917 = vmatprep.mubr.bf16.mxu0 0
        %918 = vmatmul.mubr.bf16.gmra.mrb[0].mxu0 %v874
        %v919 = vpop.f32.mrb[0].mxu0
        %v920 = vadd.f32 %v858, %v919
        %v921 = vpop.f32.mrb[0].mxu0
        %v922 = vpop.f32.mrb[0].mxu0
        %v923 = vadd.f32 %v858, %v922
        %v924 = vpop.f32.mrb[0].mxu0
        %925 = vmatprep.mubr.bf16.mxu0 0
        %926 = vmatmul.mubr.bf16.gmra.mrb[0].mxu0 %v877
        %v927 = vpop.f32.mrb[0].mxu0
        %v928 = vadd.f32 %v858, %v927
        %v929 = vpop.f32.mrb[0].mxu0
        %v930 = vpop.f32.mrb[0].mxu0
        %v931 = vadd.f32 %v858, %v930
        %v932 = vpop.f32.mrb[0].mxu0
        %933 = vmatprep.mubr.bf16.mxu0 0
        %934 = vmatmul.mubr.bf16.gmra.mrb[0].mxu0 %v880
        %v935 = vpop.f32.mrb[0].mxu0
        %v936 = vadd.f32 %v858, %v935
        %v937 = vpop.f32.mrb[0].mxu0
        %v938 = vpop.f32.mrb[0].mxu0
        %v939 = vadd.f32 %v858, %v938
        %v940 = vpop.f32.mrb[0].mxu0
        %941 = vmatprep.mubr.bf16.mxu0 0
        %942 = vmatmul.mubr.bf16.gmra.mrb[0].mxu0 %v883
        %v943 = vpop.f32.mrb[0].mxu0
        %v944 = vadd.f32 %v858, %v943
        %v945 = vpop.f32.mrb[0].mxu0
        %v946 = vpop.f32.mrb[0].mxu0
        %v947 = vadd.f32 %v858, %v946
        %v948 = vpop.f32.mrb[0].mxu0
        %949 = vdwg.mxu0
        %v950 = vmax.f32 %v920, 0.0
        %v951 = vmax.f32 %v923, 0.0
        %v952 = vmax.f32 %v928, 0.0
        %v953 = vmax.f32 %v931, 0.0
        %v954 = vmax.f32 %v936, 0.0
        %v955 = vmax.f32 %v939, 0.0
        %v956 = vmax.f32 %v944, 0.0
        %v957 = vmax.f32 %v947, 0.0
        %v958 = vld [vmem:[%s5] sm:$0xf]
        %v959 = vld [vmem:[%s5 + $0x4] sm:$0xf]
        %v960 = vld [vmem:[%s5 + $0x8] sm:$0xf]
        %v961 = vld [vmem:[%s5 + $0xc] sm:$0xf]
        %v962 = vld [vmem:[%s5 + $0x10] sm:$0xf]
        %v963 = vld [vmem:[%s5 + $0x14] sm:$0xf]
        %v964 = vld [vmem:[%s5 + $0x18] sm:$0xf]
        %v965 = vld [vmem:[%s5 + $0x1c] sm:$0xf]
        %v966 = vpack.c.bf16 %v951, %v950
        %v967 = vpack.c.bf16 %v953, %v952
        %v968 = vpack.c.bf16 %v955, %v954
        %v969 = vpack.c.bf16 %v957, %v956
        %v978 = vunpack.c.l.b16 %v958
        %v979 = vunpack.c.l.b16 %v959
        %v980 = vunpack.c.l.b16 %v960
        %v981 = vunpack.c.l.b16 %v961
        %v982 = vunpack.c.l.b16 %v962
        %v983 = vunpack.c.l.b16 %v963
        %v984 = vunpack.c.l.b16 %v964
        %v985 = vunpack.c.l.b16 %v965
        %v986 = vpack.c.b16 %v979, %v978
        %v987 = vpack.c.b16 %v981, %v980
        %v988 = vpack.c.b16 %v983, %v982
        %v989 = vpack.c.b16 %v985, %v984
        %vm994 = vcmask 523264
        %v996 = vsel %vm994, %v966, 0
        %v999 = vsel %vm994, %v967, 0
        %v1002 = vsel %vm994, %v968, 0
        %v1005 = vsel %vm994, %v969, 0
        %1007 = vmatprep.subr.bf16.mxu0 0
        %1008 = vmatpush1.bf16.msra.mxu0 %v986
        %1009 = vmatprep.subr.bf16.mxu0 0
        %1010 = vmatpush1.bf16.msra.mxu0 %v987
        %1011 = vmatprep.subr.bf16.mxu0 0
        %1012 = vmatpush1.bf16.msra.mxu0 %v988
        %1013 = vmatprep.subr.bf16.mxu0 0
        %1014 = vmatpush1.bf16.msra.mxu0 %v989
        %1015 = vmatprep.subr.bf16.mxu0 0
        %1016 = vmatpush1.bf16.msra.mxu0 0
        %1017 = vmatprep.subr.bf16.mxu0 0
        %1018 = vmatpush1.bf16.msra.mxu0 0
        %1019 = vmatprep.subr.bf16.mxu0 0
        %1020 = vmatpush1.bf16.msra.mxu0 0
        %1021 = vmatprep.subr.bf16.mxu0 0
        %1022 = vmatpush1.bf16.msra.mxu0 0
        %1023 = vmatprep.subr.bf16.mxu0 0
        %1024 = vmatpush1.bf16.msra.mxu0 0
        %1025 = vmatprep.subr.bf16.mxu0 0
        %1026 = vmatpush1.bf16.msra.mxu0 0
        %1027 = vmatprep.subr.bf16.mxu0 0
        %1028 = vmatpush1.bf16.msra.mxu0 0
        %1029 = vmatprep.subr.bf16.mxu0 0
        %1030 = vmatpush1.bf16.msra.mxu0 0
        %1031 = vmatprep.subr.bf16.mxu0 0
        %1032 = vmatpush1.bf16.msra.mxu0 0
        %1033 = vmatprep.subr.bf16.mxu0 0
        %1034 = vmatpush1.bf16.msra.mxu0 0
        %1035 = vmatprep.subr.bf16.mxu0 0
        %1036 = vmatpush1.bf16.msra.mxu0 0
        %1037 = vmatprep.subr.bf16.mxu0 0
        %1038 = vmatpush1.bf16.msra.mxu0 0
        %1039 = vmatprep.mubr.bf16.mxu0 0
        %1040 = vmatmul.mubr.bf16.gmra.mrb[0].mxu0 %v996
        %v1041 = vpop.f32.mrb[0].mxu0
        %v1042 = vadd.f32 0.0, %v1041
        %v1043 = vpop.f32.mrb[0].mxu0
        %v1044 = vpop.f32.mrb[0].mxu0
        %v1045 = vadd.f32 0.0, %v1044
        %v1046 = vpop.f32.mrb[0].mxu0
        %1047 = vmatprep.mubr.bf16.mxu0 0
        %1048 = vmatmul.mubr.bf16.gmra.mrb[0].mxu0 %v999
        %v1049 = vpop.f32.mrb[0].mxu0
        %v1050 = vadd.f32 0.0, %v1049
        %v1051 = vpop.f32.mrb[0].mxu0
        %v1052 = vpop.f32.mrb[0].mxu0
        %v1053 = vadd.f32 0.0, %v1052
        %v1054 = vpop.f32.mrb[0].mxu0
        %1055 = vmatprep.mubr.bf16.mxu0 0
        %1056 = vmatmul.mubr.bf16.gmra.mrb[0].mxu0 %v1002
        %v1057 = vpop.f32.mrb[0].mxu0
        %v1058 = vadd.f32 0.0, %v1057
        %v1059 = vpop.f32.mrb[0].mxu0
        %v1060 = vpop.f32.mrb[0].mxu0
        %v1061 = vadd.f32 0.0, %v1060
        %v1062 = vpop.f32.mrb[0].mxu0
        %1063 = vmatprep.mubr.bf16.mxu0 0
        %1064 = vmatmul.mubr.bf16.gmra.mrb[0].mxu0 %v1005
        %v1065 = vpop.f32.mrb[0].mxu0
        %v1066 = vadd.f32 0.0, %v1065
        %v1067 = vpop.f32.mrb[0].mxu0
        %v1068 = vpop.f32.mrb[0].mxu0
        %v1069 = vadd.f32 0.0, %v1068
        %v1070 = vpop.f32.mrb[0].mxu0
        %1071 = vdwg.mxu0
        %v1072 = vld [vmem:[%s455] sm:$0xff]
        %v1073 = vld [vmem:[%s455 + $0x8] sm:$0xff]
        %v1074 = vld [vmem:[%s455 + $0x10] sm:$0xff]
        %v1075 = vld [vmem:[%s455 + $0x18] sm:$0xff]
        %v1076 = vld [vmem:[%s455 + $0x20] sm:$0xff]
        %v1077 = vld [vmem:[%s455 + $0x28] sm:$0xff]
        %v1078 = vld [vmem:[%s455 + $0x30] sm:$0xff]
        %v1079 = vld [vmem:[%s455 + $0x38] sm:$0xff]
        %v1080 = vld [vmem:[%s6] sm:$0xff]
        %v1081 = vcvt.s32.f32 %v1072
        %v1082 = vcvt.s32.f32 %v1073
        %v1083 = vcvt.s32.f32 %v1074
        %v1084 = vcvt.s32.f32 %v1075
        %v1085 = vcvt.s32.f32 %v1076
        %v1086 = vcvt.s32.f32 %v1077
        %v1087 = vcvt.s32.f32 %v1078
        %v1088 = vcvt.s32.f32 %v1079
        %v1089 = vpack.c.bf16 %v1082, %v1081
        %v1090 = vpack.c.bf16 %v1084, %v1083
        %v1091 = vpack.c.bf16 %v1086, %v1085
        %v1092 = vpack.c.bf16 %v1088, %v1087
        %v1094 = vunpack.c.l.b16 %v1080
        %v1095 = vunpack.c.h.b16 %v1080
        %v1096 = vpack.c.b16 %v1094, %v1094
        %v1097 = vpack.c.b16 %v1095, %v1095
        %vm1098 = vcmask 64512
        %v1100 = vsel %vm1098, %v1089, 0
        %v1103 = vsel %vm1098, %v1090, 0
        %v1106 = vsel %vm1098, %v1091, 0
        %v1109 = vsel %vm1098, %v1092, 0
        %vm1111 = vcmask 1043456
        %v1113 = vsel %vm1111, %v1096, 0
        %v1116 = vsel %vm1111, %v1097, 0
        %1118 = vmatprep.subr.bf16.mxu0 %v1116
        %1119 = vmatpush1.bf16.msra.mxu0 %v1113
        %1120 = vmatprep.subr.bf16.mxu0 0
        %1121 = vmatpush1.bf16.msra.mxu0 0
        %1122 = vmatprep.subr.bf16.mxu0 0
        %1123 = vmatpush1.bf16.msra.mxu0 0
        %1124 = vmatprep.subr.bf16.mxu0 0
        %1125 = vmatpush1.bf16.msra.mxu0 0
        %1126 = vmatprep.subr.bf16.mxu0 0
        %1127 = vmatpush1.bf16.msra.mxu0 0
        %1128 = vmatprep.subr.bf16.mxu0 0
        %1129 = vmatpush1.bf16.msra.mxu0 0
        %1130 = vmatprep.subr.bf16.mxu0 0
        %1131 = vmatpush1.bf16.msra.mxu0 0
        %1132 = vmatprep.subr.bf16.mxu0 0
        %1133 = vmatpush1.bf16.msra.mxu0 0
        %1134 = vmatprep.subr.bf16.mxu0 0
        %1135 = vmatpush1.bf16.msra.mxu0 0
        %1136 = vmatprep.subr.bf16.mxu0 0
        %1137 = vmatpush1.bf16.msra.mxu0 0
        %1138 = vmatprep.subr.bf16.mxu0 0
        %1139 = vmatpush1.bf16.msra.mxu0 0
        %1140 = vmatprep.subr.bf16.mxu0 0
        %1141 = vmatpush1.bf16.msra.mxu0 0
        %1142 = vmatprep.subr.bf16.mxu0 0
        %1143 = vmatpush1.bf16.msra.mxu0 0
        %1144 = vmatprep.subr.bf16.mxu0 0
        %1145 = vmatpush1.bf16.msra.mxu0 0
        %1146 = vmatprep.subr.bf16.mxu0 0
        %1147 = vmatpush1.bf16.msra.mxu0 0
        %1148 = vmatprep.subr.bf16.mxu0 0
        %1149 = vmatpush1.bf16.msra.mxu0 0
        %1150 = vmatprep.mubr.bf16.mxu0 0
        %1151 = vmatmul.mubr.bf16.gmra.mrb[0].mxu0 %v1100
        %v1152 = vpop.f32.mrb[0].mxu0
        %v1153 = vadd.f32 0.0, %v1152
        %v1154 = vpop.f32.mrb[0].mxu0
        %v1155 = vadd.f32 0.0, %v1154
        %v1156 = vpop.f32.mrb[0].mxu0
        %v1157 = vadd.f32 0.0, %v1156
        %v1158 = vpop.f32.mrb[0].mxu0
        %v1159 = vadd.f32 0.0, %v1158
        %1160 = vmatprep.mubr.bf16.mxu0 0
        %1161 = vmatmul.mubr.bf16.gmra.mrb[0].mxu0 %v1103
        %v1162 = vpop.f32.mrb[0].mxu0
        %v1163 = vadd.f32 0.0, %v1162
        %v1164 = vpop.f32.mrb[0].mxu0
        %v1165 = vadd.f32 0.0, %v1164
        %v1166 = vpop.f32.mrb[0].mxu0
        %v1167 = vadd.f32 0.0, %v1166
        %v1168 = vpop.f32.mrb[0].mxu0
        %v1169 = vadd.f32 0.0, %v1168
        %1170 = vmatprep.mubr.bf16.mxu0 0
        %1171 = vmatmul.mubr.bf16.gmra.mrb[0].mxu0 %v1106
        %v1172 = vpop.f32.mrb[0].mxu0
        %v1173 = vadd.f32 0.0, %v1172
        %v1174 = vpop.f32.mrb[0].mxu0
        %v1175 = vadd.f32 0.0, %v1174
        %v1176 = vpop.f32.mrb[0].mxu0
        %v1177 = vadd.f32 0.0, %v1176
        %v1178 = vpop.f32.mrb[0].mxu0
        %v1179 = vadd.f32 0.0, %v1178
        %1180 = vmatprep.mubr.bf16.mxu0 0
        %1181 = vmatmul.mubr.bf16.gmra.mrb[0].mxu0 %v1109
        %v1182 = vpop.f32.mrb[0].mxu0
        %v1183 = vadd.f32 0.0, %v1182
        %v1184 = vpop.f32.mrb[0].mxu0
        %v1185 = vadd.f32 0.0, %v1184
        %v1186 = vpop.f32.mrb[0].mxu0
        %v1187 = vadd.f32 0.0, %v1186
        %v1188 = vpop.f32.mrb[0].mxu0
        %v1189 = vadd.f32 0.0, %v1188
        %1190 = vdwg.mxu0
        %v1191 = vld [vmem:[%s7] sm:$0x1]
        %v1193 = vlaneseq
        %v1194 = vshrl.u32 %v1193, 7
        %v1195 = vsub.s32 0, %v1194
        %v1196 = vrot.slane %v1191, %v1195
        %v1198 = vadd.f32 %v1155, %v1196
        %v1199 = vadd.f32 %v1159, %v1196
        %v1200 = vadd.f32 %v1165, %v1196
        %v1201 = vadd.f32 %v1169, %v1196
        %v1202 = vadd.f32 %v1175, %v1196
        %v1203 = vadd.f32 %v1179, %v1196
        %v1204 = vadd.f32 %v1185, %v1196
        %v1205 = vadd.f32 %v1189, %v1196
        %v1206 = vld [vmem:[%s10] sm:$0xf]
        %v1207 = vld [vmem:[%s8] sm:$0xf]
        %v1208 = vld [vmem:[%s8 + $0x4] sm:$0xf]
        %v1209 = vld [vmem:[%s8 + $0x8] sm:$0xf]
        %v1210 = vld [vmem:[%s8 + $0xc] sm:$0xf]
        %v1211 = vpack.c.bf16 %v1199, %v1198
        %v1212 = vpack.c.bf16 %v1201, %v1200
        %v1213 = vpack.c.bf16 %v1203, %v1202
        %v1214 = vpack.c.bf16 %v1205, %v1204
        %v1219 = vunpack.c.l.b16 %v1207
        %v1220 = vunpack.c.l.b16 %v1208
        %v1221 = vunpack.c.l.b16 %v1209
        %v1222 = vunpack.c.l.b16 %v1210
        %v1223 = vpack.c.b16 %v1220, %v1219
        %v1224 = vpack.c.b16 %v1222, %v1221
        %v1228 = vsel %vm872, %v1211, 0
        %v1231 = vsel %vm872, %v1212, 0
        %v1234 = vsel %vm872, %v1213, 0
        %v1237 = vsel %vm872, %v1214, 0
        %1239 = vmatprep.subr.bf16.mxu0 0
        %1240 = vmatpush1.bf16.msra.mxu0 %v1223
        %1241 = vmatprep.subr.bf16.mxu0 0
        %1242 = vmatpush1.bf16.msra.mxu0 %v1224
        %1243 = vmatprep.subr.bf16.mxu0 0
        %1244 = vmatpush1.bf16.msra.mxu0 0
        %1245 = vmatprep.subr.bf16.mxu0 0
        %1246 = vmatpush1.bf16.msra.mxu0 0
        %1247 = vmatprep.subr.bf16.mxu0 0
        %1248 = vmatpush1.bf16.msra.mxu0 0
        %1249 = vmatprep.subr.bf16.mxu0 0
        %1250 = vmatpush1.bf16.msra.mxu0 0
        %1251 = vmatprep.subr.bf16.mxu0 0
        %1252 = vmatpush1.bf16.msra.mxu0 0
        %1253 = vmatprep.subr.bf16.mxu0 0
        %1254 = vmatpush1.bf16.msra.mxu0 0
        %1255 = vmatprep.subr.bf16.mxu0 0
        %1256 = vmatpush1.bf16.msra.mxu0 0
        %1257 = vmatprep.subr.bf16.mxu0 0
        %1258 = vmatpush1.bf16.msra.mxu0 0
        %1259 = vmatprep.subr.bf16.mxu0 0
        %1260 = vmatpush1.bf16.msra.mxu0 0
        %1261 = vmatprep.subr.bf16.mxu0 0
        %1262 = vmatpush1.bf16.msra.mxu0 0
        %1263 = vmatprep.subr.bf16.mxu0 0
        %1264 = vmatpush1.bf16.msra.mxu0 0
        %1265 = vmatprep.subr.bf16.mxu0 0
        %1266 = vmatpush1.bf16.msra.mxu0 0
        %1267 = vmatprep.subr.bf16.mxu0 0
        %1268 = vmatpush1.bf16.msra.mxu0 0
        %1269 = vmatprep.subr.bf16.mxu0 0
        %1270 = vmatpush1.bf16.msra.mxu0 0
        %1271 = vmatprep.mubr.bf16.mxu0 0
        %1272 = vmatmul.mubr.bf16.gmra.mrb[0].mxu0 %v1228
        %v1273 = vpop.f32.mrb[0].mxu0
        %v1274 = vadd.f32 %v1042, %v1273
        %v1275 = vpop.f32.mrb[0].mxu0
        %v1276 = vpop.f32.mrb[0].mxu0
        %v1277 = vadd.f32 %v1045, %v1276
        %v1278 = vpop.f32.mrb[0].mxu0
        %1279 = vmatprep.mubr.bf16.mxu0 0
        %1280 = vmatmul.mubr.bf16.gmra.mrb[0].mxu0 %v1231
        %v1281 = vpop.f32.mrb[0].mxu0
        %v1282 = vadd.f32 %v1050, %v1281
        %v1283 = vpop.f32.mrb[0].mxu0
        %v1284 = vpop.f32.mrb[0].mxu0
        %v1285 = vadd.f32 %v1053, %v1284
        %v1286 = vpop.f32.mrb[0].mxu0
        %1287 = vmatprep.mubr.bf16.mxu0 0
        %1288 = vmatmul.mubr.bf16.gmra.mrb[0].mxu0 %v1234
        %v1289 = vpop.f32.mrb[0].mxu0
        %v1290 = vadd.f32 %v1058, %v1289
        %v1291 = vpop.f32.mrb[0].mxu0
        %v1292 = vpop.f32.mrb[0].mxu0
        %v1293 = vadd.f32 %v1061, %v1292
        %v1294 = vpop.f32.mrb[0].mxu0
        %1295 = vmatprep.mubr.bf16.mxu0 0
        %1296 = vmatmul.mubr.bf16.gmra.mrb[0].mxu0 %v1237
        %v1297 = vpop.f32.mrb[0].mxu0
        %v1298 = vadd.f32 %v1066, %v1297
        %v1299 = vpop.f32.mrb[0].mxu0
        %v1300 = vpop.f32.mrb[0].mxu0
        %v1301 = vadd.f32 %v1069, %v1300
        %v1302 = vpop.f32.mrb[0].mxu0
        %1303 = vdwg.mxu0
        %v1304 = vlaneseq
        %v1305 = vshrl.u32 %v1304, 7
        %v1306 = vsub.s32 0, %v1305
        %v1307 = vrot.slane %v1206, %v1306
        %v1308 = vadd.f32 %v1274, %v1307
        %v1309 = vadd.f32 %v1277, %v1307
        %v1310 = vadd.f32 %v1282, %v1307
        %v1311 = vadd.f32 %v1285, %v1307
        %v1312 = vadd.f32 %v1290, %v1307
        %v1313 = vadd.f32 %v1293, %v1307
        %v1314 = vadd.f32 %v1298, %v1307
        %v1315 = vadd.f32 %v1301, %v1307
        %v1316 = vmax.f32 %v1308, 0.0
        %v1317 = vmax.f32 %v1309, 0.0
        %v1318 = vmax.f32 %v1310, 0.0
        %v1319 = vmax.f32 %v1311, 0.0
        %v1320 = vmax.f32 %v1312, 0.0
        %v1321 = vmax.f32 %v1313, 0.0
        %v1322 = vmax.f32 %v1314, 0.0
        %v1323 = vmax.f32 %v1315, 0.0
        %v1324 = vld [vmem:[%s9] sm:$0xf]
        %v1325 = vld [vmem:[%s9 + $0x4] sm:$0xf]
        %v1326 = vld [vmem:[%s9 + $0x8] sm:$0xf]
        %v1327 = vld [vmem:[%s9 + $0xc] sm:$0xf]
        %v1328 = vld [vmem:[%s9 + $0x10] sm:$0xf]
        %v1329 = vld [vmem:[%s9 + $0x14] sm:$0xf]
        %v1330 = vld [vmem:[%s9 + $0x18] sm:$0xf]
        %v1331 = vld [vmem:[%s9 + $0x1c] sm:$0xf]
        %v1332 = vpack.c.bf16 %v1317, %v1316
        %v1333 = vpack.c.bf16 %v1319, %v1318
        %v1334 = vpack.c.bf16 %v1321, %v1320
        %v1335 = vpack.c.bf16 %v1323, %v1322
        %v1336 = vlaneseq
        %v1337 = vshrl.u32 %v1336, 7
        %v1338 = vsub.s32 1, %v1337
        %v1339 = vrot.slane %v1206, %v1338
        %v1348 = vunpack.c.l.b16 %v1324
        %v1349 = vunpack.c.l.b16 %v1325
        %v1350 = vunpack.c.l.b16 %v1326
        %v1351 = vunpack.c.l.b16 %v1327
        %v1352 = vunpack.c.l.b16 %v1328
        %v1353 = vunpack.c.l.b16 %v1329
        %v1354 = vunpack.c.l.b16 %v1330
        %v1355 = vunpack.c.l.b16 %v1331
        %v1356 = vpack.c.b16 %v1349, %v1348
        %v1357 = vpack.c.b16 %v1351, %v1350
        %v1358 = vpack.c.b16 %v1353, %v1352
        %v1359 = vpack.c.b16 %v1355, %v1354
        %v1365 = vsel %vm994, %v1332, 0
        %v1368 = vsel %vm994, %v1333, 0
        %v1371 = vsel %vm994, %v1334, 0
        %v1374 = vsel %vm994, %v1335, 0
        %1376 = vmatprep.subr.bf16.mxu0 0
        %1377 = vmatpush1.bf16.msra.mxu0 %v1356
        %1378 = vmatprep.subr.bf16.mxu0 0
        %1379 = vmatpush1.bf16.msra.mxu0 %v1357
        %1380 = vmatprep.subr.bf16.mxu0 0
        %1381 = vmatpush1.bf16.msra.mxu0 %v1358
        %1382 = vmatprep.subr.bf16.mxu0 0
        %1383 = vmatpush1.bf16.msra.mxu0 %v1359
        %1384 = vmatprep.subr.bf16.mxu0 0
        %1385 = vmatpush1.bf16.msra.mxu0 0
        %1386 = vmatprep.subr.bf16.mxu0 0
        %1387 = vmatpush1.bf16.msra.mxu0 0
        %1388 = vmatprep.subr.bf16.mxu0 0
        %1389 = vmatpush1.bf16.msra.mxu0 0
        %1390 = vmatprep.subr.bf16.mxu0 0
        %1391 = vmatpush1.bf16.msra.mxu0 0
        %1392 = vmatprep.subr.bf16.mxu0 0
        %1393 = vmatpush1.bf16.msra.mxu0 0
        %1394 = vmatprep.subr.bf16.mxu0 0
        %1395 = vmatpush1.bf16.msra.mxu0 0
        %1396 = vmatprep.subr.bf16.mxu0 0
        %1397 = vmatpush1.bf16.msra.mxu0 0
        %1398 = vmatprep.subr.bf16.mxu0 0
        %1399 = vmatpush1.bf16.msra.mxu0 0
        %1400 = vmatprep.subr.bf16.mxu0 0
        %1401 = vmatpush1.bf16.msra.mxu0 0
        %1402 = vmatprep.subr.bf16.mxu0 0
        %1403 = vmatpush1.bf16.msra.mxu0 0
        %1404 = vmatprep.subr.bf16.mxu0 0
        %1405 = vmatpush1.bf16.msra.mxu0 0
        %1406 = vmatprep.subr.bf16.mxu0 0
        %1407 = vmatpush1.bf16.msra.mxu0 0
        %1408 = vmatprep.mubr.bf16.mxu0 0
        %1409 = vmatmul.mubr.bf16.gmra.mrb[0].mxu0 %v1365
        %v1410 = vpop.f32.mrb[0].mxu0
        %v1411 = vadd.f32 %v1339, %v1410
        %v1412 = vpop.f32.mrb[0].mxu0
        %v1413 = vpop.f32.mrb[0].mxu0
        %v1414 = vadd.f32 %v1339, %v1413
        %v1415 = vpop.f32.mrb[0].mxu0
        %1416 = vmatprep.mubr.bf16.mxu0 0
        %1417 = vmatmul.mubr.bf16.gmra.mrb[0].mxu0 %v1368
        %v1418 = vpop.f32.mrb[0].mxu0
        %v1419 = vadd.f32 %v1339, %v1418
        %v1420 = vpop.f32.mrb[0].mxu0
        %v1421 = vpop.f32.mrb[0].mxu0
        %v1422 = vadd.f32 %v1339, %v1421
        %v1423 = vpop.f32.mrb[0].mxu0
        %1424 = vmatprep.mubr.bf16.mxu0 0
        %1425 = vmatmul.mubr.bf16.gmra.mrb[0].mxu0 %v1371
        %v1426 = vpop.f32.mrb[0].mxu0
        %v1427 = vadd.f32 %v1339, %v1426
        %v1428 = vpop.f32.mrb[0].mxu0
        %v1429 = vpop.f32.mrb[0].mxu0
        %v1430 = vadd.f32 %v1339, %v1429
        %v1431 = vpop.f32.mrb[0].mxu0
        %1432 = vmatprep.mubr.bf16.mxu0 0
        %1433 = vmatmul.mubr.bf16.gmra.mrb[0].mxu0 %v1374
        %v1434 = vpop.f32.mrb[0].mxu0
        %v1435 = vadd.f32 %v1339, %v1434
        %v1436 = vpop.f32.mrb[0].mxu0
        %v1437 = vpop.f32.mrb[0].mxu0
        %v1438 = vadd.f32 %v1339, %v1437
        %v1439 = vpop.f32.mrb[0].mxu0
        %1440 = vdwg.mxu0
        %v1441 = vadd.f32 %v1198, %v1411
        %v1442 = vadd.f32 %v1199, %v1414
        %v1443 = vadd.f32 %v1200, %v1419
        %v1444 = vadd.f32 %v1201, %v1422
        %v1445 = vadd.f32 %v1202, %v1427
        %v1446 = vadd.f32 %v1203, %v1430
        %v1447 = vadd.f32 %v1204, %v1435
        %v1448 = vadd.f32 %v1205, %v1438
        %v1449 = vsel %vm872, %v1441, 0.0
        %1450 = vadd.xlane.f32.xlu0 %v1449
        %v1451 = vpop.xlane.xlu0 %1450
        %v1452 = vsel %vm872, %v1442, 0.0
        %1453 = vadd.xlane.f32.xlu0 %v1452
        %v1454 = vpop.xlane.xlu0 %1453
        %v1455 = vsel %vm872, %v1443, 0.0
        %1456 = vadd.xlane.f32.xlu0 %v1455
        %v1457 = vpop.xlane.xlu0 %1456
        %v1458 = vsel %vm872, %v1444, 0.0
        %1459 = vadd.xlane.f32.xlu0 %v1458
        %v1460 = vpop.xlane.xlu0 %1459
        %v1461 = vsel %vm872, %v1445, 0.0
        %1462 = vadd.xlane.f32.xlu0 %v1461
        %v1463 = vpop.xlane.xlu0 %1462
        %v1464 = vsel %vm872, %v1446, 0.0
        %1465 = vadd.xlane.f32.xlu0 %v1464
        %v1466 = vpop.xlane.xlu0 %1465
        %v1467 = vsel %vm872, %v1447, 0.0
        %1468 = vadd.xlane.f32.xlu0 %v1467
        %v1469 = vpop.xlane.xlu0 %1468
        %v1470 = vsel %vm872, %v1448, 0.0
        %1471 = vadd.xlane.f32.xlu0 %v1470
        %v1472 = vpop.xlane.xlu0 %1471
        %v1473 = vrcp.pop 32.0
        %v1474 = vmul.f32 %v1451, %v1473
        %v1475 = vmul.f32 %v1454, %v1473
        %v1476 = vmul.f32 %v1457, %v1473
        %v1477 = vmul.f32 %v1460, %v1473
        %v1478 = vmul.f32 %v1463, %v1473
        %v1479 = vmul.f32 %v1466, %v1473
        %v1480 = vmul.f32 %v1469, %v1473
        %v1481 = vmul.f32 %v1472, %v1473
        %v1482 = vsub.f32 %v1441, %v1474
        %v1483 = vsub.f32 %v1442, %v1475
        %v1484 = vsub.f32 %v1443, %v1476
        %v1485 = vsub.f32 %v1444, %v1477
        %v1486 = vsub.f32 %v1445, %v1478
        %v1487 = vsub.f32 %v1446, %v1479
        %v1488 = vsub.f32 %v1447, %v1480
        %v1489 = vsub.f32 %v1448, %v1481
        %v1490 = vmul.f32 %v1482, %v1482
        %v1491 = vmul.f32 %v1483, %v1483
        %v1492 = vmul.f32 %v1484, %v1484
        %v1493 = vmul.f32 %v1485, %v1485
        %v1494 = vmul.f32 %v1486, %v1486
        %v1495 = vmul.f32 %v1487, %v1487
        %v1496 = vmul.f32 %v1488, %v1488
        %v1497 = vmul.f32 %v1489, %v1489
        %v1498 = vsel %vm872, %v1490, 0.0
        %1499 = vadd.xlane.f32.xlu0 %v1498
        %v1500 = vpop.xlane.xlu0 %1499
        %v1501 = vsel %vm872, %v1491, 0.0
        %1502 = vadd.xlane.f32.xlu0 %v1501
        %v1503 = vpop.xlane.xlu0 %1502
        %v1504 = vsel %vm872, %v1492, 0.0
        %1505 = vadd.xlane.f32.xlu0 %v1504
        %v1506 = vpop.xlane.xlu0 %1505
        %v1507 = vsel %vm872, %v1493, 0.0
        %1508 = vadd.xlane.f32.xlu0 %v1507
        %v1509 = vpop.xlane.xlu0 %1508
        %v1510 = vsel %vm872, %v1494, 0.0
        %1511 = vadd.xlane.f32.xlu0 %v1510
        %v1512 = vpop.xlane.xlu0 %1511
        %v1513 = vsel %vm872, %v1495, 0.0
        %1514 = vadd.xlane.f32.xlu0 %v1513
        %v1515 = vpop.xlane.xlu0 %1514
        %v1516 = vsel %vm872, %v1496, 0.0
        %1517 = vadd.xlane.f32.xlu0 %v1516
        %v1518 = vpop.xlane.xlu0 %1517
        %v1519 = vsel %vm872, %v1497, 0.0
        %1520 = vadd.xlane.f32.xlu0 %v1519
        %v1521 = vpop.xlane.xlu0 %1520
        %v1522 = vmul.f32 %v1500, %v1473
        %v1523 = vmul.f32 %v1503, %v1473
        %v1524 = vmul.f32 %v1506, %v1473
        %v1525 = vmul.f32 %v1509, %v1473
        %v1526 = vmul.f32 %v1512, %v1473
        %v1527 = vmul.f32 %v1515, %v1473
        %v1528 = vmul.f32 %v1518, %v1473
        %v1529 = vmul.f32 %v1521, %v1473
        %v1530 = vadd.f32 %v1522, 1e-05
        %v1531 = vadd.f32 %v1523, 1e-05
        %v1532 = vadd.f32 %v1524, 1e-05
        %v1533 = vadd.f32 %v1525, 1e-05
        %v1534 = vadd.f32 %v1526, 1e-05
        %v1535 = vadd.f32 %v1527, 1e-05
        %v1536 = vadd.f32 %v1528, 1e-05
        %v1537 = vadd.f32 %v1529, 1e-05
        %v1538 = vrsqrt.pop %v1530
        %v1539 = vrsqrt.pop %v1531
        %v1540 = vrsqrt.pop %v1532
        %v1541 = vrsqrt.pop %v1533
        %v1542 = vrsqrt.pop %v1534
        %v1543 = vrsqrt.pop %v1535
        %v1544 = vrsqrt.pop %v1536
        %v1545 = vrsqrt.pop %v1537
        %v1546 = vmul.f32 %v1482, %v1538
        %v1547 = vmul.f32 %v1483, %v1539
        %v1548 = vmul.f32 %v1484, %v1540
        %v1549 = vmul.f32 %v1485, %v1541
        %v1550 = vmul.f32 %v1486, %v1542
        %v1551 = vmul.f32 %v1487, %v1543
        %v1552 = vmul.f32 %v1488, %v1544
        %v1553 = vmul.f32 %v1489, %v1545
        %v1554 = vlaneseq
        %v1555 = vshrl.u32 %v1554, 7
        %v1556 = vsub.s32 2, %v1555
        %v1557 = vrot.slane %v1206, %v1556
        %v1558 = vmul.f32 %v1546, %v1557
        %v1559 = vmul.f32 %v1547, %v1557
        %v1560 = vmul.f32 %v1548, %v1557
        %v1561 = vmul.f32 %v1549, %v1557
        %v1562 = vmul.f32 %v1550, %v1557
        %v1563 = vmul.f32 %v1551, %v1557
        %v1564 = vmul.f32 %v1552, %v1557
        %v1565 = vmul.f32 %v1553, %v1557
        %v1566 = vlaneseq
        %v1567 = vshrl.u32 %v1566, 7
        %v1568 = vsub.s32 3, %v1567
        %v1569 = vrot.slane %v1206, %v1568
        %v1570 = vadd.f32 %v1558, %v1569
        %v1571 = vadd.f32 %v1559, %v1569
        %v1572 = vadd.f32 %v1560, %v1569
        %v1573 = vadd.f32 %v1561, %v1569
        %v1574 = vadd.f32 %v1562, %v1569
        %v1575 = vadd.f32 %v1563, %v1569
        %v1576 = vadd.f32 %v1564, %v1569
        %v1577 = vadd.f32 %v1565, %v1569
        %s1578 = scalar_lea.vmem %s10, 4
        %v1579 = vld [vmem:[%s1578] sm:$0xf]
        %s1580 = scalar_lea.vmem %s8, 16
        %v1581 = vld [vmem:[%s1580] sm:$0xf]
        %v1582 = vld [vmem:[%s1580 + $0x4] sm:$0xf]
        %v1583 = vld [vmem:[%s1580 + $0x8] sm:$0xf]
        %v1584 = vld [vmem:[%s1580 + $0xc] sm:$0xf]
        %v1585 = vpack.c.bf16 %v1571, %v1570
        %v1586 = vpack.c.bf16 %v1573, %v1572
        %v1587 = vpack.c.bf16 %v1575, %v1574
        %v1588 = vpack.c.bf16 %v1577, %v1576
        %v1593 = vunpack.c.l.b16 %v1581
        %v1594 = vunpack.c.l.b16 %v1582
        %v1595 = vunpack.c.l.b16 %v1583
        %v1596 = vunpack.c.l.b16 %v1584
        %v1597 = vpack.c.b16 %v1594, %v1593
        %v1598 = vpack.c.b16 %v1596, %v1595
        %1609 = vrot.lane.b32.xlu0 %v1042, 64
        %v1610 = vpop.permute.xlu0 %1609
        %1611 = vrot.lane.b32.xlu0 %v1045, 64
        %v1612 = vpop.permute.xlu0 %1611
        %1613 = vrot.lane.b32.xlu0 %v1050, 64
        %v1614 = vpop.permute.xlu0 %1613
        %1615 = vrot.lane.b32.xlu0 %v1053, 64
        %v1616 = vpop.permute.xlu0 %1615
        %1617 = vrot.lane.b32.xlu0 %v1058, 64
        %v1618 = vpop.permute.xlu0 %1617
        %1619 = vrot.lane.b32.xlu0 %v1061, 64
        %v1620 = vpop.permute.xlu0 %1619
        %1621 = vrot.lane.b32.xlu0 %v1066, 64
        %v1622 = vpop.permute.xlu0 %1621
        %1623 = vrot.lane.b32.xlu0 %v1069, 64
        %v1624 = vpop.permute.xlu0 %1623
        %v1634 = vsel %vm872, %v1585, 0
        %v1637 = vsel %vm872, %v1586, 0
        %v1640 = vsel %vm872, %v1587, 0
        %v1643 = vsel %vm872, %v1588, 0
        %1645 = vmatprep.subr.bf16.mxu0 0
        %1646 = vmatpush1.bf16.msra.mxu0 %v1597
        %1647 = vmatprep.subr.bf16.mxu0 0
        %1648 = vmatpush1.bf16.msra.mxu0 %v1598
        %1649 = vmatprep.subr.bf16.mxu0 0
        %1650 = vmatpush1.bf16.msra.mxu0 0
        %1651 = vmatprep.subr.bf16.mxu0 0
        %1652 = vmatpush1.bf16.msra.mxu0 0
        %1653 = vmatprep.subr.bf16.mxu0 0
        %1654 = vmatpush1.bf16.msra.mxu0 0
        %1655 = vmatprep.subr.bf16.mxu0 0
        %1656 = vmatpush1.bf16.msra.mxu0 0
        %1657 = vmatprep.subr.bf16.mxu0 0
        %1658 = vmatpush1.bf16.msra.mxu0 0
        %1659 = vmatprep.subr.bf16.mxu0 0
        %1660 = vmatpush1.bf16.msra.mxu0 0
        %1661 = vmatprep.subr.bf16.mxu0 0
        %1662 = vmatpush1.bf16.msra.mxu0 0
        %1663 = vmatprep.subr.bf16.mxu0 0
        %1664 = vmatpush1.bf16.msra.mxu0 0
        %1665 = vmatprep.subr.bf16.mxu0 0
        %1666 = vmatpush1.bf16.msra.mxu0 0
        %1667 = vmatprep.subr.bf16.mxu0 0
        %1668 = vmatpush1.bf16.msra.mxu0 0
        %1669 = vmatprep.subr.bf16.mxu0 0
        %1670 = vmatpush1.bf16.msra.mxu0 0
        %1671 = vmatprep.subr.bf16.mxu0 0
        %1672 = vmatpush1.bf16.msra.mxu0 0
        %1673 = vmatprep.subr.bf16.mxu0 0
        %1674 = vmatpush1.bf16.msra.mxu0 0
        %1675 = vmatprep.subr.bf16.mxu0 0
        %1676 = vmatpush1.bf16.msra.mxu0 0
        %1677 = vmatprep.mubr.bf16.mxu0 0
        %1678 = vmatmul.mubr.bf16.gmra.mrb[0].mxu0 %v1634
        %v1679 = vpop.f32.mrb[0].mxu0
        %v1680 = vadd.f32 %v1610, %v1679
        %v1681 = vpop.f32.mrb[0].mxu0
        %v1682 = vpop.f32.mrb[0].mxu0
        %v1683 = vadd.f32 %v1612, %v1682
        %v1684 = vpop.f32.mrb[0].mxu0
        %1685 = vmatprep.mubr.bf16.mxu0 0
        %1686 = vmatmul.mubr.bf16.gmra.mrb[0].mxu0 %v1637
        %v1687 = vpop.f32.mrb[0].mxu0
        %v1688 = vadd.f32 %v1614, %v1687
        %v1689 = vpop.f32.mrb[0].mxu0
        %v1690 = vpop.f32.mrb[0].mxu0
        %v1691 = vadd.f32 %v1616, %v1690
        %v1692 = vpop.f32.mrb[0].mxu0
        %1693 = vmatprep.mubr.bf16.mxu0 0
        %1694 = vmatmul.mubr.bf16.gmra.mrb[0].mxu0 %v1640
        %v1695 = vpop.f32.mrb[0].mxu0
        %v1696 = vadd.f32 %v1618, %v1695
        %v1697 = vpop.f32.mrb[0].mxu0
        %v1698 = vpop.f32.mrb[0].mxu0
        %v1699 = vadd.f32 %v1620, %v1698
        %v1700 = vpop.f32.mrb[0].mxu0
        %1701 = vmatprep.mubr.bf16.mxu0 0
        %1702 = vmatmul.mubr.bf16.gmra.mrb[0].mxu0 %v1643
        %v1703 = vpop.f32.mrb[0].mxu0
        %v1704 = vadd.f32 %v1622, %v1703
        %v1705 = vpop.f32.mrb[0].mxu0
        %v1706 = vpop.f32.mrb[0].mxu0
        %v1707 = vadd.f32 %v1624, %v1706
        %v1708 = vpop.f32.mrb[0].mxu0
        %1709 = vdwg.mxu0
        %v1710 = vlaneseq
        %v1711 = vshrl.u32 %v1710, 7
        %v1712 = vsub.s32 0, %v1711
        %v1713 = vrot.slane %v1579, %v1712
        %v1714 = vadd.f32 %v1680, %v1713
        %v1715 = vadd.f32 %v1683, %v1713
        %v1716 = vadd.f32 %v1688, %v1713
        %v1717 = vadd.f32 %v1691, %v1713
        %v1718 = vadd.f32 %v1696, %v1713
        %v1719 = vadd.f32 %v1699, %v1713
        %v1720 = vadd.f32 %v1704, %v1713
        %v1721 = vadd.f32 %v1707, %v1713
        %v1722 = vmax.f32 %v1714, 0.0
        %v1723 = vmax.f32 %v1715, 0.0
        %v1724 = vmax.f32 %v1716, 0.0
        %v1725 = vmax.f32 %v1717, 0.0
        %v1726 = vmax.f32 %v1718, 0.0
        %v1727 = vmax.f32 %v1719, 0.0
        %v1728 = vmax.f32 %v1720, 0.0
        %v1729 = vmax.f32 %v1721, 0.0
        %s1730 = scalar_lea.vmem %s9, 32
        %v1731 = vld [vmem:[%s1730] sm:$0xf]
        %v1732 = vld [vmem:[%s1730 + $0x4] sm:$0xf]
        %v1733 = vld [vmem:[%s1730 + $0x8] sm:$0xf]
        %v1734 = vld [vmem:[%s1730 + $0xc] sm:$0xf]
        %v1735 = vld [vmem:[%s1730 + $0x10] sm:$0xf]
        %v1736 = vld [vmem:[%s1730 + $0x14] sm:$0xf]
        %v1737 = vld [vmem:[%s1730 + $0x18] sm:$0xf]
        %v1738 = vld [vmem:[%s1730 + $0x1c] sm:$0xf]
        %v1739 = vpack.c.bf16 %v1723, %v1722
        %v1740 = vpack.c.bf16 %v1725, %v1724
        %v1741 = vpack.c.bf16 %v1727, %v1726
        %v1742 = vpack.c.bf16 %v1729, %v1728
        %v1743 = vlaneseq
        %v1744 = vshrl.u32 %v1743, 7
        %v1745 = vsub.s32 1, %v1744
        %v1746 = vrot.slane %v1579, %v1745
        %v1755 = vunpack.c.l.b16 %v1731
        %v1756 = vunpack.c.l.b16 %v1732
        %v1757 = vunpack.c.l.b16 %v1733
        %v1758 = vunpack.c.l.b16 %v1734
        %v1759 = vunpack.c.l.b16 %v1735
        %v1760 = vunpack.c.l.b16 %v1736
        %v1761 = vunpack.c.l.b16 %v1737
        %v1762 = vunpack.c.l.b16 %v1738
        %v1763 = vpack.c.b16 %v1756, %v1755
        %v1764 = vpack.c.b16 %v1758, %v1757
        %v1765 = vpack.c.b16 %v1760, %v1759
        %v1766 = vpack.c.b16 %v1762, %v1761
        %v1772 = vsel %vm994, %v1739, 0
        %v1775 = vsel %vm994, %v1740, 0
        %v1778 = vsel %vm994, %v1741, 0
        %v1781 = vsel %vm994, %v1742, 0
        %1783 = vmatprep.subr.bf16.mxu0 0
        %1784 = vmatpush1.bf16.msra.mxu0 %v1763
        %1785 = vmatprep.subr.bf16.mxu0 0
        %1786 = vmatpush1.bf16.msra.mxu0 %v1764
        %1787 = vmatprep.subr.bf16.mxu0 0
        %1788 = vmatpush1.bf16.msra.mxu0 %v1765
        %1789 = vmatprep.subr.bf16.mxu0 0
        %1790 = vmatpush1.bf16.msra.mxu0 %v1766
        %1791 = vmatprep.subr.bf16.mxu0 0
        %1792 = vmatpush1.bf16.msra.mxu0 0
        %1793 = vmatprep.subr.bf16.mxu0 0
        %1794 = vmatpush1.bf16.msra.mxu0 0
        %1795 = vmatprep.subr.bf16.mxu0 0
        %1796 = vmatpush1.bf16.msra.mxu0 0
        %1797 = vmatprep.subr.bf16.mxu0 0
        %1798 = vmatpush1.bf16.msra.mxu0 0
        %1799 = vmatprep.subr.bf16.mxu0 0
        %1800 = vmatpush1.bf16.msra.mxu0 0
        %1801 = vmatprep.subr.bf16.mxu0 0
        %1802 = vmatpush1.bf16.msra.mxu0 0
        %1803 = vmatprep.subr.bf16.mxu0 0
        %1804 = vmatpush1.bf16.msra.mxu0 0
        %1805 = vmatprep.subr.bf16.mxu0 0
        %1806 = vmatpush1.bf16.msra.mxu0 0
        %1807 = vmatprep.subr.bf16.mxu0 0
        %1808 = vmatpush1.bf16.msra.mxu0 0
        %1809 = vmatprep.subr.bf16.mxu0 0
        %1810 = vmatpush1.bf16.msra.mxu0 0
        %1811 = vmatprep.subr.bf16.mxu0 0
        %1812 = vmatpush1.bf16.msra.mxu0 0
        %1813 = vmatprep.subr.bf16.mxu0 0
        %1814 = vmatpush1.bf16.msra.mxu0 0
        %1815 = vmatprep.mubr.bf16.mxu0 0
        %1816 = vmatmul.mubr.bf16.gmra.mrb[0].mxu0 %v1772
        %v1817 = vpop.f32.mrb[0].mxu0
        %v1818 = vadd.f32 %v1746, %v1817
        %v1819 = vpop.f32.mrb[0].mxu0
        %v1820 = vpop.f32.mrb[0].mxu0
        %v1821 = vadd.f32 %v1746, %v1820
        %v1822 = vpop.f32.mrb[0].mxu0
        %1823 = vmatprep.mubr.bf16.mxu0 0
        %1824 = vmatmul.mubr.bf16.gmra.mrb[0].mxu0 %v1775
        %v1825 = vpop.f32.mrb[0].mxu0
        %v1826 = vadd.f32 %v1746, %v1825
        %v1827 = vpop.f32.mrb[0].mxu0
        %v1828 = vpop.f32.mrb[0].mxu0
        %v1829 = vadd.f32 %v1746, %v1828
        %v1830 = vpop.f32.mrb[0].mxu0
        %1831 = vmatprep.mubr.bf16.mxu0 0
        %1832 = vmatmul.mubr.bf16.gmra.mrb[0].mxu0 %v1778
        %v1833 = vpop.f32.mrb[0].mxu0
        %v1834 = vadd.f32 %v1746, %v1833
        %v1835 = vpop.f32.mrb[0].mxu0
        %v1836 = vpop.f32.mrb[0].mxu0
        %v1837 = vadd.f32 %v1746, %v1836
        %v1838 = vpop.f32.mrb[0].mxu0
        %1839 = vmatprep.mubr.bf16.mxu0 0
        %1840 = vmatmul.mubr.bf16.gmra.mrb[0].mxu0 %v1781
        %v1841 = vpop.f32.mrb[0].mxu0
        %v1842 = vadd.f32 %v1746, %v1841
        %v1843 = vpop.f32.mrb[0].mxu0
        %v1844 = vpop.f32.mrb[0].mxu0
        %v1845 = vadd.f32 %v1746, %v1844
        %v1846 = vpop.f32.mrb[0].mxu0
        %1847 = vdwg.mxu0
        %v1848 = vadd.f32 %v1570, %v1818
        %v1849 = vadd.f32 %v1571, %v1821
        %v1850 = vadd.f32 %v1572, %v1826
        %v1851 = vadd.f32 %v1573, %v1829
        %v1852 = vadd.f32 %v1574, %v1834
        %v1853 = vadd.f32 %v1575, %v1837
        %v1854 = vadd.f32 %v1576, %v1842
        %v1855 = vadd.f32 %v1577, %v1845
        %v1856 = vsel %vm872, %v1848, 0.0
        %1857 = vadd.xlane.f32.xlu0 %v1856
        %v1858 = vpop.xlane.xlu0 %1857
        %v1859 = vsel %vm872, %v1849, 0.0
        %1860 = vadd.xlane.f32.xlu0 %v1859
        %v1861 = vpop.xlane.xlu0 %1860
        %v1862 = vsel %vm872, %v1850, 0.0
        %1863 = vadd.xlane.f32.xlu0 %v1862
        %v1864 = vpop.xlane.xlu0 %1863
        %v1865 = vsel %vm872, %v1851, 0.0
        %1866 = vadd.xlane.f32.xlu0 %v1865
        %v1867 = vpop.xlane.xlu0 %1866
        %v1868 = vsel %vm872, %v1852, 0.0
        %1869 = vadd.xlane.f32.xlu0 %v1868
        %v1870 = vpop.xlane.xlu0 %1869
        %v1871 = vsel %vm872, %v1853, 0.0
        %1872 = vadd.xlane.f32.xlu0 %v1871
        %v1873 = vpop.xlane.xlu0 %1872
        %v1874 = vsel %vm872, %v1854, 0.0
        %1875 = vadd.xlane.f32.xlu0 %v1874
        %v1876 = vpop.xlane.xlu0 %1875
        %v1877 = vsel %vm872, %v1855, 0.0
        %1878 = vadd.xlane.f32.xlu0 %v1877
        %v1879 = vpop.xlane.xlu0 %1878
        %v1880 = vmul.f32 %v1858, %v1473
        %v1881 = vmul.f32 %v1861, %v1473
        %v1882 = vmul.f32 %v1864, %v1473
        %v1883 = vmul.f32 %v1867, %v1473
        %v1884 = vmul.f32 %v1870, %v1473
        %v1885 = vmul.f32 %v1873, %v1473
        %v1886 = vmul.f32 %v1876, %v1473
        %v1887 = vmul.f32 %v1879, %v1473
        %v1888 = vsub.f32 %v1848, %v1880
        %v1889 = vsub.f32 %v1849, %v1881
        %v1890 = vsub.f32 %v1850, %v1882
        %v1891 = vsub.f32 %v1851, %v1883
        %v1892 = vsub.f32 %v1852, %v1884
        %v1893 = vsub.f32 %v1853, %v1885
        %v1894 = vsub.f32 %v1854, %v1886
        %v1895 = vsub.f32 %v1855, %v1887
        %v1896 = vmul.f32 %v1888, %v1888
        %v1897 = vmul.f32 %v1889, %v1889
        %v1898 = vmul.f32 %v1890, %v1890
        %v1899 = vmul.f32 %v1891, %v1891
        %v1900 = vmul.f32 %v1892, %v1892
        %v1901 = vmul.f32 %v1893, %v1893
        %v1902 = vmul.f32 %v1894, %v1894
        %v1903 = vmul.f32 %v1895, %v1895
        %v1904 = vsel %vm872, %v1896, 0.0
        %1905 = vadd.xlane.f32.xlu0 %v1904
        %v1906 = vpop.xlane.xlu0 %1905
        %v1907 = vsel %vm872, %v1897, 0.0
        %1908 = vadd.xlane.f32.xlu0 %v1907
        %v1909 = vpop.xlane.xlu0 %1908
        %v1910 = vsel %vm872, %v1898, 0.0
        %1911 = vadd.xlane.f32.xlu0 %v1910
        %v1912 = vpop.xlane.xlu0 %1911
        %v1913 = vsel %vm872, %v1899, 0.0
        %1914 = vadd.xlane.f32.xlu0 %v1913
        %v1915 = vpop.xlane.xlu0 %1914
        %v1916 = vsel %vm872, %v1900, 0.0
        %1917 = vadd.xlane.f32.xlu0 %v1916
        %v1918 = vpop.xlane.xlu0 %1917
        %v1919 = vsel %vm872, %v1901, 0.0
        %1920 = vadd.xlane.f32.xlu0 %v1919
        %v1921 = vpop.xlane.xlu0 %1920
        %v1922 = vsel %vm872, %v1902, 0.0
        %1923 = vadd.xlane.f32.xlu0 %v1922
        %v1924 = vpop.xlane.xlu0 %1923
        %v1925 = vsel %vm872, %v1903, 0.0
        %1926 = vadd.xlane.f32.xlu0 %v1925
        %v1927 = vpop.xlane.xlu0 %1926
        %v1928 = vmul.f32 %v1906, %v1473
        %v1929 = vmul.f32 %v1909, %v1473
        %v1930 = vmul.f32 %v1912, %v1473
        %v1931 = vmul.f32 %v1915, %v1473
        %v1932 = vmul.f32 %v1918, %v1473
        %v1933 = vmul.f32 %v1921, %v1473
        %v1934 = vmul.f32 %v1924, %v1473
        %v1935 = vmul.f32 %v1927, %v1473
        %v1936 = vadd.f32 %v1928, 1e-05
        %v1937 = vadd.f32 %v1929, 1e-05
        %v1938 = vadd.f32 %v1930, 1e-05
        %v1939 = vadd.f32 %v1931, 1e-05
        %v1940 = vadd.f32 %v1932, 1e-05
        %v1941 = vadd.f32 %v1933, 1e-05
        %v1942 = vadd.f32 %v1934, 1e-05
        %v1943 = vadd.f32 %v1935, 1e-05
        %v1944 = vrsqrt.pop %v1936
        %v1945 = vrsqrt.pop %v1937
        %v1946 = vrsqrt.pop %v1938
        %v1947 = vrsqrt.pop %v1939
        %v1948 = vrsqrt.pop %v1940
        %v1949 = vrsqrt.pop %v1941
        %v1950 = vrsqrt.pop %v1942
        %v1951 = vrsqrt.pop %v1943
        %v1952 = vmul.f32 %v1888, %v1944
        %v1953 = vmul.f32 %v1889, %v1945
        %v1954 = vmul.f32 %v1890, %v1946
        %v1955 = vmul.f32 %v1891, %v1947
        %v1956 = vmul.f32 %v1892, %v1948
        %v1957 = vmul.f32 %v1893, %v1949
        %v1958 = vmul.f32 %v1894, %v1950
        %v1959 = vmul.f32 %v1895, %v1951
        %v1960 = vld [vmem:[%s11] sm:$0xf]
        %v1961 = vld [vmem:[%s11 + $0x4] sm:$0xf]
        %v1962 = vld [vmem:[%s11 + $0x8] sm:$0xf]
        %v1963 = vld [vmem:[%s11 + $0xc] sm:$0xf]
        %v1964 = vpack.c.bf16 %v1953, %v1952
        %v1965 = vpack.c.bf16 %v1955, %v1954
        %v1966 = vpack.c.bf16 %v1957, %v1956
        %v1967 = vpack.c.bf16 %v1959, %v1958
        %v1968 = vld [vmem:[%s12] sm:$0x1]
        %v1970 = vlaneseq
        %v1971 = vshrl.u32 %v1970, 7
        %v1972 = vsub.s32 0, %v1971
        %v1973 = vrot.slane %v1968, %v1972
        %v1979 = vunpack.c.l.b16 %v1960
        %v1980 = vunpack.c.l.b16 %v1961
        %v1981 = vunpack.c.l.b16 %v1962
        %v1982 = vunpack.c.l.b16 %v1963
        %v1983 = vpack.c.b16 %v1980, %v1979
        %v1984 = vpack.c.b16 %v1982, %v1981
        %v1988 = vsel %vm872, %v1964, 0
        %v1991 = vsel %vm872, %v1965, 0
        %v1994 = vsel %vm872, %v1966, 0
        %v1997 = vsel %vm872, %v1967, 0
        %1999 = vmatprep.subr.bf16.mxu0 0
        %2000 = vmatpush1.bf16.msra.mxu0 %v1983
        %2001 = vmatprep.subr.bf16.mxu0 0
        %2002 = vmatpush1.bf16.msra.mxu0 %v1984
        %2003 = vmatprep.subr.bf16.mxu0 0
        %2004 = vmatpush1.bf16.msra.mxu0 0
        %2005 = vmatprep.subr.bf16.mxu0 0
        %2006 = vmatpush1.bf16.msra.mxu0 0
        %2007 = vmatprep.subr.bf16.mxu0 0
        %2008 = vmatpush1.bf16.msra.mxu0 0
        %2009 = vmatprep.subr.bf16.mxu0 0
        %2010 = vmatpush1.bf16.msra.mxu0 0
        %2011 = vmatprep.subr.bf16.mxu0 0
        %2012 = vmatpush1.bf16.msra.mxu0 0
        %2013 = vmatprep.subr.bf16.mxu0 0
        %2014 = vmatpush1.bf16.msra.mxu0 0
        %2015 = vmatprep.subr.bf16.mxu0 0
        %2016 = vmatpush1.bf16.msra.mxu0 0
        %2017 = vmatprep.subr.bf16.mxu0 0
        %2018 = vmatpush1.bf16.msra.mxu0 0
        %2019 = vmatprep.subr.bf16.mxu0 0
        %2020 = vmatpush1.bf16.msra.mxu0 0
        %2021 = vmatprep.subr.bf16.mxu0 0
        %2022 = vmatpush1.bf16.msra.mxu0 0
        %2023 = vmatprep.subr.bf16.mxu0 0
        %2024 = vmatpush1.bf16.msra.mxu0 0
        %2025 = vmatprep.subr.bf16.mxu0 0
        %2026 = vmatpush1.bf16.msra.mxu0 0
        %2027 = vmatprep.subr.bf16.mxu0 0
        %2028 = vmatpush1.bf16.msra.mxu0 0
        %2029 = vmatprep.subr.bf16.mxu0 0
        %2030 = vmatpush1.bf16.msra.mxu0 0
        %2031 = vmatprep.mubr.bf16.mxu0 0
        %2032 = vmatmul.mubr.bf16.gmra.mrb[0].mxu0 %v1988
        %v2033 = vpop.f32.mrb[0].mxu0
        %v2034 = vadd.f32 %v1973, %v2033
        %v2035 = vpop.f32.mrb[0].mxu0
        %v2036 = vpop.f32.mrb[0].mxu0
        %v2037 = vadd.f32 %v1973, %v2036
        %v2038 = vpop.f32.mrb[0].mxu0
        %2039 = vmatprep.mubr.bf16.mxu0 0
        %2040 = vmatmul.mubr.bf16.gmra.mrb[0].mxu0 %v1991
        %v2041 = vpop.f32.mrb[0].mxu0
        %v2042 = vadd.f32 %v1973, %v2041
        %v2043 = vpop.f32.mrb[0].mxu0
        %v2044 = vpop.f32.mrb[0].mxu0
        %v2045 = vadd.f32 %v1973, %v2044
        %v2046 = vpop.f32.mrb[0].mxu0
        %2047 = vmatprep.mubr.bf16.mxu0 0
        %2048 = vmatmul.mubr.bf16.gmra.mrb[0].mxu0 %v1994
        %v2049 = vpop.f32.mrb[0].mxu0
        %v2050 = vadd.f32 %v1973, %v2049
        %v2051 = vpop.f32.mrb[0].mxu0
        %v2052 = vpop.f32.mrb[0].mxu0
        %v2053 = vadd.f32 %v1973, %v2052
        %v2054 = vpop.f32.mrb[0].mxu0
        %2055 = vmatprep.mubr.bf16.mxu0 0
        %2056 = vmatmul.mubr.bf16.gmra.mrb[0].mxu0 %v1997
        %v2057 = vpop.f32.mrb[0].mxu0
        %v2058 = vadd.f32 %v1973, %v2057
        %v2059 = vpop.f32.mrb[0].mxu0
        %v2060 = vpop.f32.mrb[0].mxu0
        %v2061 = vadd.f32 %v1973, %v2060
        %v2062 = vpop.f32.mrb[0].mxu0
        %2063 = vdwg.mxu0
        %v2064 = vcvt.s32.f32 %v817
        %v2065 = vadd.f32 %v2064, 0.5
        %v2066 = vmul.f32 %v2065, 0.0625
        %v2067 = vfloor.f32 %v2066
        %v2068 = vmul.f32 %v2067, 16.0
        %v2069 = vsub.f32 %v2064, %v2068
        %v2070 = vsub.f32 %v1153, %v2069
        %v2071 = vsub.f32 %v1157, %v2069
        %v2072 = vsub.f32 %v1163, %v2069
        %v2073 = vsub.f32 %v1167, %v2069
        %v2074 = vsub.f32 %v1173, %v2069
        %v2075 = vsub.f32 %v1177, %v2069
        %v2076 = vsub.f32 %v1183, %v2069
        %v2077 = vsub.f32 %v1187, %v2069
        %v2078 = vand.u32 2147483647, %v2070
        %v2079 = vand.u32 2147483647, %v2071
        %v2080 = vand.u32 2147483647, %v2072
        %v2081 = vand.u32 2147483647, %v2073
        %v2082 = vand.u32 2147483647, %v2074
        %v2083 = vand.u32 2147483647, %v2075
        %v2084 = vand.u32 2147483647, %v2076
        %v2085 = vand.u32 2147483647, %v2077
        %vm2086 = vcmp.lt.f32.partialorder %v2078, 0.5
        %vm2087 = vcmp.lt.f32.partialorder %v2079, 0.5
        %vm2088 = vcmp.lt.f32.partialorder %v2080, 0.5
        %vm2089 = vcmp.lt.f32.partialorder %v2081, 0.5
        %vm2090 = vcmp.lt.f32.partialorder %v2082, 0.5
        %vm2091 = vcmp.lt.f32.partialorder %v2083, 0.5
        %vm2092 = vcmp.lt.f32.partialorder %v2084, 0.5
        %vm2093 = vcmp.lt.f32.partialorder %v2085, 0.5
        %v2094 = vsel %vm2086, 1, 0
        %v2095 = vsel %vm2087, 1, 0
        %v2096 = vsel %vm2088, 1, 0
        %v2097 = vsel %vm2089, 1, 0
        %v2098 = vsel %vm2090, 1, 0
        %v2099 = vsel %vm2091, 1, 0
        %v2100 = vsel %vm2092, 1, 0
        %v2101 = vsel %vm2093, 1, 0
        %v2102 = vcvt.s32.f32 %v2094
        %v2103 = vcvt.s32.f32 %v2095
        %v2104 = vcvt.s32.f32 %v2096
        %v2105 = vcvt.s32.f32 %v2097
        %v2106 = vcvt.s32.f32 %v2098
        %v2107 = vcvt.s32.f32 %v2099
        %v2108 = vcvt.s32.f32 %v2100
        %v2109 = vcvt.s32.f32 %v2101
        %v2110 = vadd.f32 %v2034, %v2102
        %v2111 = vadd.f32 %v2037, %v2103
        %v2112 = vadd.f32 %v2042, %v2104
        %v2113 = vadd.f32 %v2045, %v2105
        %v2114 = vadd.f32 %v2050, %v2106
        %v2115 = vadd.f32 %v2053, %v2107
        %v2116 = vadd.f32 %v2058, %v2108
        %v2117 = vadd.f32 %v2061, %v2109
        %2118 = vst [vmem:[%s450] sm:$0xff] %v2110
        %2119 = vst [vmem:[%s450 + $0x8] sm:$0xff] %v2111
        %2120 = vst [vmem:[%s450 + $0x10] sm:$0xff] %v2112
        %2121 = vst [vmem:[%s450 + $0x18] sm:$0xff] %v2113
        %2122 = vst [vmem:[%s450 + $0x20] sm:$0xff] %v2114
        %2123 = vst [vmem:[%s450 + $0x28] sm:$0xff] %v2115
        %2124 = vst [vmem:[%s450 + $0x30] sm:$0xff] %v2116
        %2125 = vst [vmem:[%s450 + $0x38] sm:$0xff] %v2117
        %s2126 = sand.u32 %s318, 1
        %s2127 = scalar_lea.sflag [#allocation3], %s2126
        %s2128 = sand.u32 %s318, 1
        %s2129 = smul.addr %s2128, 64
        %s2130 = scalar_lea.vmem [#allocation2], %s2129
        // Predicated region
        $region73: #{tpu_custom_call.1} parent=71 // pred_check
          %p2131 = pneg %p328
        $region74: #{tpu_custom_call.1} parent=71 // pred_check_branch
          %2133 = sbr.rel (%p2131) target = $region76
        $region75: #{tpu_custom_call.1} parent=71 // pred_region
          %s2134 = smul.u32 8, %s27
          %s2136 = ssub.s32 1024, 1024
          %2137 = vsyncadd %s2127, %s2136
          %s2138 = smul.addr %s2134, 128
          %s2139 = scalar_lea.hbm %s13, %s2138
          %s2140 = sshll.u32 %s2130, 4
          %s2141 = int_to_ptr.vmem [resolvable:$true] %s2140
          %2146 = dma.vmem_to_hbm [thread:$0]  %s2141, 1024, %s2139, %s2127, 128, 128, 8
        $region76: #{tpu_custom_call.1} parent=71 // pred_fallthru
          _
      $region72: #{tpu_custom_call.1} parent=5 // pred_fallthru
        _
      %p2147 = scmp.le.s32.totalorder 2, %s22
      // Predicated region
      $region77: #{tpu_custom_call.1} parent=5 // pred_check
        %p2148 = pneg %p2147
      $region78: #{tpu_custom_call.1} parent=5 // pred_check_branch
        %2150 = sbr.rel (%p2148) target = $region80
      $region79: #{tpu_custom_call.1} parent=5 // pred_region
        %s2151 = ssub.s32 %s22, 2
        // Predicated region
        $region81: #{tpu_custom_call.1} parent=79 // pred_check
          %p2152 = pneg %p334
        $region82: #{tpu_custom_call.1} parent=79 // pred_check_branch
          %2154 = sbr.rel (%p2152) target = $region84
        $region83: #{tpu_custom_call.1} parent=79 // pred_region
          %s2155 = sand.u32 %s319, 1
          %s2156 = scalar_lea.sflag [#allocation3], %s2155
          %s2157 = sand.u32 %s319, 1
          %s2158 = smul.addr %s2157, 64
          %s2159 = scalar_lea.vmem [#allocation2], %s2158
          %2160 = dma.done %s2156, 1024
        $region84: #{tpu_custom_call.1} parent=79 // pred_fallthru
          _
      $region80: #{tpu_custom_call.1} parent=5 // pred_fallthru
        _
    $region6: #{tpu_custom_call.1} parent=1 // loop_footer
      %s26 = sadd.s32 1, %s22
    $region7: #{tpu_custom_call.1} parent=1 // loop_footer_branch
      %21 = sbr.rel target = $region3
    $region8: #{tpu_custom_call.1} parent=1 // loop_exit
      _
    %2161 = vsyncpa [#allocation3], 1
    %s2162 = scalar_lea.sflag [#allocation3], 1
    %2163 = vsyncpa %s2162, 1

</llo_original>
